<compile_context>
chip_gen: v7x
topology: tpu7x:2x2x1
jax: 0.10.0
libtpu: 0.0.40
codegen_flags: <defaults>
</compile_context>

<pallas_src>
import jax
import jax.numpy as jnp
from jax.experimental import pallas as pl
from jax.experimental.pallas import tpu as pltpu


# -----------------------------------------------------------------------------
# Fused Pallas kernel: the full TemporalConvNet stack
# -----------------------------------------------------------------------------
def _make_tcn_kernel(T, kernel_size, layer_cfgs):
    """layer_cfgs: list of dicts with keys cin, cout, dilation, has_downsample."""
    K = kernel_size

    def causal_conv(x, w_flat, b, d, cols_ref):
        # x: (T, Cin) f32 value.  w_flat: (K*Cin, Cout).  b: (1, Cout).
        Cin = x.shape[1]
        KC = K * Cin
        # Zero-fill the im2col buffer: this realizes the causal left padding
        # (pad + chomp) for every tap column in-kernel.
        cols_ref[...] = jnp.zeros_like(cols_ref)
        for j in range(K):                 # static unrolled taps
            s = (K - 1 - j) * d            # causal right-shift of tap j
            if s >= T:
                continue                   # tap sees only padding -> stays zero
            # rows [s:T) of tap-j's lane column hold x[0:T-s); rows [0:s) are 0
            cols_ref[pl.ds(s, T - s), pl.ds(j * Cin, Cin)] = x[0:T - s, :]
        cols = cols_ref[:, pl.ds(0, KC)]   # (T, K*Cin)
        return jnp.dot(cols, w_flat, preferred_element_type=jnp.float32) + b

    def kernel(*refs):
        x_ref = refs[0]
        out_ref = refs[-2]
        cols_ref = refs[-1]
        pidx = 1

        x = x_ref[0].astype(jnp.float32)   # (T, C0)
        for cfg in layer_cfgs:
            d = cfg["dilation"]
            w1 = refs[pidx][...].astype(jnp.float32); pidx += 1
            b1 = refs[pidx][...].astype(jnp.float32); pidx += 1
            w2 = refs[pidx][...].astype(jnp.float32); pidx += 1
            b2 = refs[pidx][...].astype(jnp.float32); pidx += 1

            # conv1 (dilated causal) + chomp; dropout1 = identity (eval mode)
            h = causal_conv(x, w1, b1, d, cols_ref)
            # conv2 (dilated causal) + chomp; dropout2 = identity (eval mode)
            o = causal_conv(h, w2, b2, d, cols_ref)
            # TODO(synk): training-mode dropout (p=0.2) not implemented; this
            # is the eval-mode forward.

            if cfg["has_downsample"]:
                wd = refs[pidx][...].astype(jnp.float32); pidx += 1
                bd = refs[pidx][...].astype(jnp.float32); pidx += 1
                res = jnp.dot(x, wd, preferred_element_type=jnp.float32) + bd
            else:
                res = x
            x = jnp.tanh(o + res)          # (T, Cout)

        out_ref[0] = x.astype(out_ref.dtype)

    return kernel


def tcn_forward(x_nct, layers, kernel_size):
    """Full network forward. x_nct: (N, C, T) PyTorch layout -> (N, C_last, T)."""
    x = jnp.transpose(x_nct, (0, 2, 1)).astype(jnp.float32)   # (B, T, C0)
    B, T, C0 = x.shape
    K = kernel_size

    inputs = [x]
    in_specs = [pl.BlockSpec((1, T, C0), lambda b: (b, 0, 0))]

    layer_cfgs = []
    kc_max = 8
    for layer in layers:
        p = layer["params"]
        cin, cout = p["w1"].shape[1], p["w1"].shape[2]
        layer_cfgs.append(dict(cin=cin, cout=cout, dilation=layer["dilation"],
                               has_downsample=layer["has_downsample"]))
        kc_max = max(kc_max, K * cin, K * cout)

        # Fold taps into the contraction dim: (K, Cin, Cout) -> (K*Cin, Cout)
        arrs = [p["w1"].reshape(K * cin, cout), p["b1"],
                p["w2"].reshape(K * cout, cout), p["b2"]]
        if layer["has_downsample"]:
            arrs += [p["wd"], p["bd"]]
        for a in arrs:
            inputs.append(a)
            in_specs.append(pl.BlockSpec(a.shape, lambda b: (0, 0)))

    c_last = layer_cfgs[-1]["cout"]
    kernel = _make_tcn_kernel(T, K, layer_cfgs)

    out = pl.pallas_call(
        kernel,
        out_shape=jax.ShapeDtypeStruct((B, T, c_last), jnp.float32),
        grid_spec=pltpu.PrefetchScalarGridSpec(
            num_scalar_prefetch=0,
            grid=(B,),
            in_specs=in_specs,
            out_specs=pl.BlockSpec((1, T, c_last), lambda b: (b, 0, 0)),
            scratch_shapes=[pltpu.VMEM((T, kc_max), jnp.float32)],
        ),
        compiler_params=pltpu.CompilerParams(
            dimension_semantics=("parallel",),
        ),
    )(*inputs)

    return jnp.transpose(out, (0, 2, 1))  # back to (N, C, T)


# -----------------------------------------------------------------------------
# Parameter setup (plain JAX glue): weight_norm folded into the weight
# -----------------------------------------------------------------------------
def _weight_norm_fold(v, g):
    # v: (Cout, Cin, K) PyTorch layout, g: (Cout,). weight = g * v / ||v||_row
    norm = jnp.sqrt(jnp.sum(v * v, axis=(1, 2), keepdims=True))
    return v * (g[:, None, None] / norm)


def _init_conv_params(key, cin, cout, k):
    kv, kg, kb = jax.random.split(key, 3)
    v = 0.01 * jax.random.normal(kv, (cout, cin, k), jnp.float32)
    # weight_norm init: g = ||v|| (folded weight == v); keep the explicit fold
    # to reproduce the weight_norm forward semantics.
    g = jnp.sqrt(jnp.sum(v * v, axis=(1, 2)))
    w = _weight_norm_fold(v, g)                     # (Cout, Cin, K)
    w = jnp.transpose(w, (2, 1, 0))                 # -> (K, Cin, Cout)
    bound = 1.0 / jnp.sqrt(cin * k)
    b = jax.random.uniform(kb, (1, cout), jnp.float32, -bound, bound)
    return w, b


def make_tcn_params(key, channels, kernel_size):
    """Mirrors TemporalConvNet.__init__: layer i uses in=channels[i-1]
    (so layer 0 takes channels[-1] inputs — the PyTorch code's indexing)."""
    layers = []
    for i in range(len(channels)):
        key, k1, k2, k3 = jax.random.split(key, 4)
        dilation = 2 ** i
        cin = channels[i - 1]
        cout = channels[i]
        w1, b1 = _init_conv_params(k1, cin, cout, kernel_size)
        w2, b2 = _init_conv_params(k2, cout, cout, kernel_size)
        p = {"w1": w1, "b1": b1, "w2": w2, "b2": b2}
        has_downsample = cin != cout
        if has_downsample:
            kd, kb = jax.random.split(k3)
            wd = 0.01 * jax.random.normal(kd, (cin, cout), jnp.float32)
            bound = 1.0 / jnp.sqrt(cin)
            bd = jax.random.uniform(kb, (1, cout), jnp.float32, -bound, bound)
            p["wd"] = wd
            p["bd"] = bd
        layers.append(
            dict(params=p, dilation=dilation, has_downsample=has_downsample)
        )
    return layers


# -----------------------------------------------------------------------------
# Pure-JAX reference (for correctness check)
# -----------------------------------------------------------------------------
def _block_ref(x_btc, p, K, d, has_downsample):
    B, T, _ = x_btc.shape
    P = (K - 1) * d
    xp = jnp.pad(x_btc, ((0, 0), (P, 0), (0, 0)))
    h = 0.0
    for j in range(K):
        h = h + jnp.einsum("btc,cd->btd", xp[:, j * d: j * d + T, :], p["w1"][j])
    h = h + p["b1"][0]
    hp = jnp.pad(h, ((0, 0), (P, 0), (0, 0)))
    o = 0.0
    for j in range(K):
        o = o + jnp.einsum("btc,cd->btd", hp[:, j * d: j * d + T, :], p["w2"][j])
    o = o + p["b2"][0]
    if has_downsample:
        res = jnp.einsum("btc,cd->btd", x_btc, p["wd"]) + p["bd"][0]
    else:
        res = x_btc
    return jnp.tanh(o + res)


def tcn_ref(x_nct, layers, kernel_size):
    x = jnp.transpose(x_nct, (0, 2, 1))
    for layer in layers:
        x = _block_ref(x, layer["params"], kernel_size, layer["dilation"],
                       layer["has_downsample"])
    return jnp.transpose(x, (0, 2, 1))


# -----------------------------------------------------------------------------
if __name__ == "__main__":
    # config.model.channels = [8, 8, 4], kernel_size = 3, dimensions = 1
    channels = [8, 8, 4]
    kernel_size = 3
    B, T = 2, 16
    Cin = channels[-1]  # layer 0 takes channels[-1] inputs (PyTorch indexing)

    key = jax.random.PRNGKey(0)
    kx, kp = jax.random.split(key)
    x = jax.random.normal(kx, (B, Cin, T), jnp.float32)  # PyTorch NCT layout

    layers = make_tcn_params(kp, channels, kernel_size)

    out = jax.block_until_ready(tcn_forward(x, layers, kernel_size))
    ref = jax.block_until_ready(tcn_ref(x, layers, kernel_size))

    assert out.shape == (B, channels[-1], T), out.shape
    assert jnp.allclose(out, ref, atol=1e-4, rtol=1e-4), float(
        jnp.max(jnp.abs(out - ref))
    )

    print("KERNEL_OK")
</pallas_src>

<mosaic_0001>
module attributes {stable_mosaic.version = 11 : i64} {
  func.func @kernel(%arg0: i32, %arg1: memref<1x16x4xf32, #tpu.memory_space<vmem>>, %arg2: memref<12x8xf32, #tpu.memory_space<vmem>>, %arg3: memref<1x8xf32, #tpu.memory_space<vmem>>, %arg4: memref<24x8xf32, #tpu.memory_space<vmem>>, %arg5: memref<1x8xf32, #tpu.memory_space<vmem>>, %arg6: memref<4x8xf32, #tpu.memory_space<vmem>>, %arg7: memref<1x8xf32, #tpu.memory_space<vmem>>, %arg8: memref<24x8xf32, #tpu.memory_space<vmem>>, %arg9: memref<1x8xf32, #tpu.memory_space<vmem>>, %arg10: memref<24x8xf32, #tpu.memory_space<vmem>>, %arg11: memref<1x8xf32, #tpu.memory_space<vmem>>, %arg12: memref<24x4xf32, #tpu.memory_space<vmem>>, %arg13: memref<1x4xf32, #tpu.memory_space<vmem>>, %arg14: memref<12x4xf32, #tpu.memory_space<vmem>>, %arg15: memref<1x4xf32, #tpu.memory_space<vmem>>, %arg16: memref<8x4xf32, #tpu.memory_space<vmem>>, %arg17: memref<1x4xf32, #tpu.memory_space<vmem>>, %arg18: memref<1x16x4xf32, #tpu.memory_space<vmem>>, %arg19: memref<16x24xf32, #tpu.memory_space<vmem>>) attributes {dimension_semantics = [#tpu.dimension_semantics<parallel>], iteration_bounds = array<i64: 2>, scalar_prefetch = 0 : i64, scratch_operands = 1 : i64, tpu.core_type = #tpu.core_type<tc>, window_params = [{transform_indices = @transform_0, window_bounds = array<i64: 1, 16, 4>}, {pipeline_mode = #tpu.pipeline_mode<synchronous>, transform_indices = @transform_1, window_bounds = array<i64: 12, 8>}, {pipeline_mode = #tpu.pipeline_mode<synchronous>, transform_indices = @transform_2, window_bounds = array<i64: 1, 8>}, {pipeline_mode = #tpu.pipeline_mode<synchronous>, transform_indices = @transform_3, window_bounds = array<i64: 24, 8>}, {pipeline_mode = #tpu.pipeline_mode<synchronous>, transform_indices = @transform_4, window_bounds = array<i64: 1, 8>}, {pipeline_mode = #tpu.pipeline_mode<synchronous>, transform_indices = @transform_5, window_bounds = array<i64: 4, 8>}, {pipeline_mode = #tpu.pipeline_mode<synchronous>, transform_indices = @transform_6, window_bounds = array<i64: 1, 8>}, {pipeline_mode = #tpu.pipeline_mode<synchronous>, transform_indices = @transform_7, window_bounds = array<i64: 24, 8>}, {pipeline_mode = #tpu.pipeline_mode<synchronous>, transform_indices = @transform_8, window_bounds = array<i64: 1, 8>}, {pipeline_mode = #tpu.pipeline_mode<synchronous>, transform_indices = @transform_9, window_bounds = array<i64: 24, 8>}, {pipeline_mode = #tpu.pipeline_mode<synchronous>, transform_indices = @transform_10, window_bounds = array<i64: 1, 8>}, {pipeline_mode = #tpu.pipeline_mode<synchronous>, transform_indices = @transform_11, window_bounds = array<i64: 24, 4>}, {pipeline_mode = #tpu.pipeline_mode<synchronous>, transform_indices = @transform_12, window_bounds = array<i64: 1, 4>}, {pipeline_mode = #tpu.pipeline_mode<synchronous>, transform_indices = @transform_13, window_bounds = array<i64: 12, 4>}, {pipeline_mode = #tpu.pipeline_mode<synchronous>, transform_indices = @transform_14, window_bounds = array<i64: 1, 4>}, {pipeline_mode = #tpu.pipeline_mode<synchronous>, transform_indices = @transform_15, window_bounds = array<i64: 8, 4>}, {pipeline_mode = #tpu.pipeline_mode<synchronous>, transform_indices = @transform_16, window_bounds = array<i64: 1, 4>}, {transform_indices = @transform_17, window_bounds = array<i64: 1, 16, 4>}]} {
    %c0 = arith.constant 0 : index
    %c0_0 = arith.constant 0 : index
    %c0_1 = arith.constant 0 : index
    %0 = vector.load %arg1[%c0, %c0_0, %c0_1] : memref<1x16x4xf32, #tpu.memory_space<vmem>>, vector<1x16x4xf32>
    %1 = vector.shape_cast %0 : vector<1x16x4xf32> to vector<16x4xf32>
    %c0_2 = arith.constant 0 : index
    %c0_3 = arith.constant 0 : index
    %2 = vector.load %arg2[%c0_2, %c0_3] : memref<12x8xf32, #tpu.memory_space<vmem>>, vector<12x8xf32>
    %c0_4 = arith.constant 0 : index
    %c0_5 = arith.constant 0 : index
    %3 = vector.load %arg3[%c0_4, %c0_5] : memref<1x8xf32, #tpu.memory_space<vmem>>, vector<1x8xf32>
    %c0_6 = arith.constant 0 : index
    %c0_7 = arith.constant 0 : index
    %4 = vector.load %arg4[%c0_6, %c0_7] : memref<24x8xf32, #tpu.memory_space<vmem>>, vector<24x8xf32>
    %c0_8 = arith.constant 0 : index
    %c0_9 = arith.constant 0 : index
    %5 = vector.load %arg5[%c0_8, %c0_9] : memref<1x8xf32, #tpu.memory_space<vmem>>, vector<1x8xf32>
    %cst = arith.constant 0.000000e+00 : f32
    %6 = vector.broadcast %cst : f32 to vector<16x24xf32>
    %c0_10 = arith.constant 0 : index
    %c0_11 = arith.constant 0 : index
    %7 = vector.load %arg19[%c0_10, %c0_11] : memref<16x24xf32, #tpu.memory_space<vmem>>, vector<16x24xf32>
    tpu.vector_store %arg19[%c0_10, %c0_11], %6 {strides = array<i32>} : memref<16x24xf32, #tpu.memory_space<vmem>>, vector<16x24xf32>,
    %8 = vector.extract_strided_slice %1 {offsets = [0, 0], sizes = [14, 4], strides = [1, 1]} : vector<16x4xf32> to vector<14x4xf32>
    %c2 = arith.constant 2 : index
    %c0_12 = arith.constant 0 : index
    %9 = vector.load %arg19[%c2, %c0_12] : memref<16x24xf32, #tpu.memory_space<vmem>>, vector<14x4xf32>
    tpu.vector_store %arg19[%c2, %c0_12], %8 {strides = array<i32>} : memref<16x24xf32, #tpu.memory_space<vmem>>, vector<14x4xf32>,
    %10 = vector.extract_strided_slice %1 {offsets = [0, 0], sizes = [15, 4], strides = [1, 1]} : vector<16x4xf32> to vector<15x4xf32>
    %c1 = arith.constant 1 : index
    %c4 = arith.constant 4 : index
    %11 = vector.load %arg19[%c1, %c4] : memref<16x24xf32, #tpu.memory_space<vmem>>, vector<15x4xf32>
    tpu.vector_store %arg19[%c1, %c4], %10 {strides = array<i32>} : memref<16x24xf32, #tpu.memory_space<vmem>>, vector<15x4xf32>,
    %c0_13 = arith.constant 0 : index
    %c8 = arith.constant 8 : index
    %12 = vector.load %arg19[%c0_13, %c8] : memref<16x24xf32, #tpu.memory_space<vmem>>, vector<16x4xf32>
    tpu.vector_store %arg19[%c0_13, %c8], %1 {strides = array<i32>} : memref<16x24xf32, #tpu.memory_space<vmem>>, vector<16x4xf32>,
    %c0_14 = arith.constant 0 : index
    %c0_15 = arith.constant 0 : index
    %13 = vector.load %arg19[%c0_14, %c0_15] : memref<16x24xf32, #tpu.memory_space<vmem>>, vector<16x12xf32>
    %cst_16 = arith.constant dense<0.000000e+00> : vector<16x8xf32>
    %14 = tpu.matmul %13, %2, %cst_16 {dimension_numbers = #tpu.dot_dimension_numbers<[1], [0], [0], [1], [0, 0, 1, 1], [], []>} : vector<16x12xf32>, vector<12x8xf32>, vector<16x8xf32> -> vector<16x8xf32>
    %15 = vector.broadcast %3 : vector<1x8xf32> to vector<16x8xf32>
    %16 = arith.addf %14, %15 : vector<16x8xf32>
    %cst_17 = arith.constant 0.000000e+00 : f32
    %17 = vector.broadcast %cst_17 : f32 to vector<16x24xf32>
    %c0_18 = arith.constant 0 : index
    %c0_19 = arith.constant 0 : index
    %18 = vector.load %arg19[%c0_18, %c0_19] : memref<16x24xf32, #tpu.memory_space<vmem>>, vector<16x24xf32>
    tpu.vector_store %arg19[%c0_18, %c0_19], %17 {strides = array<i32>} : memref<16x24xf32, #tpu.memory_space<vmem>>, vector<16x24xf32>,
    %19 = vector.extract_strided_slice %16 {offsets = [0, 0], sizes = [14, 8], strides = [1, 1]} : vector<16x8xf32> to vector<14x8xf32>
    %c2_20 = arith.constant 2 : index
    %c0_21 = arith.constant 0 : index
    %20 = vector.load %arg19[%c2_20, %c0_21] : memref<16x24xf32, #tpu.memory_space<vmem>>, vector<14x8xf32>
    tpu.vector_store %arg19[%c2_20, %c0_21], %19 {strides = array<i32>} : memref<16x24xf32, #tpu.memory_space<vmem>>, vector<14x8xf32>,
    %21 = vector.extract_strided_slice %16 {offsets = [0, 0], sizes = [15, 8], strides = [1, 1]} : vector<16x8xf32> to vector<15x8xf32>
    %c1_22 = arith.constant 1 : index
    %c8_23 = arith.constant 8 : index
    %22 = vector.load %arg19[%c1_22, %c8_23] : memref<16x24xf32, #tpu.memory_space<vmem>>, vector<15x8xf32>
    tpu.vector_store %arg19[%c1_22, %c8_23], %21 {strides = array<i32>} : memref<16x24xf32, #tpu.memory_space<vmem>>, vector<15x8xf32>,
    %c0_24 = arith.constant 0 : index
    %c16 = arith.constant 16 : index
    %23 = vector.load %arg19[%c0_24, %c16] : memref<16x24xf32, #tpu.memory_space<vmem>>, vector<16x8xf32>
    tpu.vector_store %arg19[%c0_24, %c16], %16 {strides = array<i32>} : memref<16x24xf32, #tpu.memory_space<vmem>>, vector<16x8xf32>,
    %c0_25 = arith.constant 0 : index
    %c0_26 = arith.constant 0 : index
    %24 = vector.load %arg19[%c0_25, %c0_26] : memref<16x24xf32, #tpu.memory_space<vmem>>, vector<16x24xf32>
    %cst_27 = arith.constant dense<0.000000e+00> : vector<16x8xf32>
    %25 = tpu.matmul %24, %4, %cst_27 {dimension_numbers = #tpu.dot_dimension_numbers<[1], [0], [0], [1], [0, 0, 1, 1], [], []>} : vector<16x24xf32>, vector<24x8xf32>, vector<16x8xf32> -> vector<16x8xf32>
    %26 = vector.broadcast %5 : vector<1x8xf32> to vector<16x8xf32>
    %27 = arith.addf %25, %26 : vector<16x8xf32>
    %c0_28 = arith.constant 0 : index
    %c0_29 = arith.constant 0 : index
    %28 = vector.load %arg6[%c0_28, %c0_29] : memref<4x8xf32, #tpu.memory_space<vmem>>, vector<4x8xf32>
    %c0_30 = arith.constant 0 : index
    %c0_31 = arith.constant 0 : index
    %29 = vector.load %arg7[%c0_30, %c0_31] : memref<1x8xf32, #tpu.memory_space<vmem>>, vector<1x8xf32>
    %cst_32 = arith.constant dense<0.000000e+00> : vector<16x8xf32>
    %30 = tpu.matmul %1, %28, %cst_32 {dimension_numbers = #tpu.dot_dimension_numbers<[1], [0], [0], [1], [0, 0, 1, 1], [], []>} : vector<16x4xf32>, vector<4x8xf32>, vector<16x8xf32> -> vector<16x8xf32>
    %31 = vector.broadcast %29 : vector<1x8xf32> to vector<16x8xf32>
    %32 = arith.addf %30, %31 : vector<16x8xf32>
    %33 = arith.addf %27, %32 : vector<16x8xf32>
    %34 = math.tanh %33 : vector<16x8xf32>
    %c0_33 = arith.constant 0 : index
    %c0_34 = arith.constant 0 : index
    %35 = vector.load %arg8[%c0_33, %c0_34] : memref<24x8xf32, #tpu.memory_space<vmem>>, vector<24x8xf32>
    %c0_35 = arith.constant 0 : index
    %c0_36 = arith.constant 0 : index
    %36 = vector.load %arg9[%c0_35, %c0_36] : memref<1x8xf32, #tpu.memory_space<vmem>>, vector<1x8xf32>
    %c0_37 = arith.constant 0 : index
    %c0_38 = arith.constant 0 : index
    %37 = vector.load %arg10[%c0_37, %c0_38] : memref<24x8xf32, #tpu.memory_space<vmem>>, vector<24x8xf32>
    %c0_39 = arith.constant 0 : index
    %c0_40 = arith.constant 0 : index
    %38 = vector.load %arg11[%c0_39, %c0_40] : memref<1x8xf32, #tpu.memory_space<vmem>>, vector<1x8xf32>
    %cst_41 = arith.constant 0.000000e+00 : f32
    %39 = vector.broadcast %cst_41 : f32 to vector<16x24xf32>
    %c0_42 = arith.constant 0 : index
    %c0_43 = arith.constant 0 : index
    %40 = vector.load %arg19[%c0_42, %c0_43] : memref<16x24xf32, #tpu.memory_space<vmem>>, vector<16x24xf32>
    tpu.vector_store %arg19[%c0_42, %c0_43], %39 {strides = array<i32>} : memref<16x24xf32, #tpu.memory_space<vmem>>, vector<16x24xf32>,
    %41 = vector.extract_strided_slice %34 {offsets = [0, 0], sizes = [12, 8], strides = [1, 1]} : vector<16x8xf32> to vector<12x8xf32>
    %c4_44 = arith.constant 4 : index
    %c0_45 = arith.constant 0 : index
    %42 = vector.load %arg19[%c4_44, %c0_45] : memref<16x24xf32, #tpu.memory_space<vmem>>, vector<12x8xf32>
    tpu.vector_store %arg19[%c4_44, %c0_45], %41 {strides = array<i32>} : memref<16x24xf32, #tpu.memory_space<vmem>>, vector<12x8xf32>,
    %43 = vector.extract_strided_slice %34 {offsets = [0, 0], sizes = [14, 8], strides = [1, 1]} : vector<16x8xf32> to vector<14x8xf32>
    %c2_46 = arith.constant 2 : index
    %c8_47 = arith.constant 8 : index
    %44 = vector.load %arg19[%c2_46, %c8_47] : memref<16x24xf32, #tpu.memory_space<vmem>>, vector<14x8xf32>
    tpu.vector_store %arg19[%c2_46, %c8_47], %43 {strides = array<i32>} : memref<16x24xf32, #tpu.memory_space<vmem>>, vector<14x8xf32>,
    %c0_48 = arith.constant 0 : index
    %c16_49 = arith.constant 16 : index
    %45 = vector.load %arg19[%c0_48, %c16_49] : memref<16x24xf32, #tpu.memory_space<vmem>>, vector<16x8xf32>
    tpu.vector_store %arg19[%c0_48, %c16_49], %34 {strides = array<i32>} : memref<16x24xf32, #tpu.memory_space<vmem>>, vector<16x8xf32>,
    %c0_50 = arith.constant 0 : index
    %c0_51 = arith.constant 0 : index
    %46 = vector.load %arg19[%c0_50, %c0_51] : memref<16x24xf32, #tpu.memory_space<vmem>>, vector<16x24xf32>
    %cst_52 = arith.constant dense<0.000000e+00> : vector<16x8xf32>
    %47 = tpu.matmul %46, %35, %cst_52 {dimension_numbers = #tpu.dot_dimension_numbers<[1], [0], [0], [1], [0, 0, 1, 1], [], []>} : vector<16x24xf32>, vector<24x8xf32>, vector<16x8xf32> -> vector<16x8xf32>
    %48 = vector.broadcast %36 : vector<1x8xf32> to vector<16x8xf32>
    %49 = arith.addf %47, %48 : vector<16x8xf32>
    %cst_53 = arith.constant 0.000000e+00 : f32
    %50 = vector.broadcast %cst_53 : f32 to vector<16x24xf32>
    %c0_54 = arith.constant 0 : index
    %c0_55 = arith.constant 0 : index
    %51 = vector.load %arg19[%c0_54, %c0_55] : memref<16x24xf32, #tpu.memory_space<vmem>>, vector<16x24xf32>
    tpu.vector_store %arg19[%c0_54, %c0_55], %50 {strides = array<i32>} : memref<16x24xf32, #tpu.memory_space<vmem>>, vector<16x24xf32>,
    %52 = vector.extract_strided_slice %49 {offsets = [0, 0], sizes = [12, 8], strides = [1, 1]} : vector<16x8xf32> to vector<12x8xf32>
    %c4_56 = arith.constant 4 : index
    %c0_57 = arith.constant 0 : index
    %53 = vector.load %arg19[%c4_56, %c0_57] : memref<16x24xf32, #tpu.memory_space<vmem>>, vector<12x8xf32>
    tpu.vector_store %arg19[%c4_56, %c0_57], %52 {strides = array<i32>} : memref<16x24xf32, #tpu.memory_space<vmem>>, vector<12x8xf32>,
    %54 = vector.extract_strided_slice %49 {offsets = [0, 0], sizes = [14, 8], strides = [1, 1]} : vector<16x8xf32> to vector<14x8xf32>
    %c2_58 = arith.constant 2 : index
    %c8_59 = arith.constant 8 : index
    %55 = vector.load %arg19[%c2_58, %c8_59] : memref<16x24xf32, #tpu.memory_space<vmem>>, vector<14x8xf32>
    tpu.vector_store %arg19[%c2_58, %c8_59], %54 {strides = array<i32>} : memref<16x24xf32, #tpu.memory_space<vmem>>, vector<14x8xf32>,
    %c0_60 = arith.constant 0 : index
    %c16_61 = arith.constant 16 : index
    %56 = vector.load %arg19[%c0_60, %c16_61] : memref<16x24xf32, #tpu.memory_space<vmem>>, vector<16x8xf32>
    tpu.vector_store %arg19[%c0_60, %c16_61], %49 {strides = array<i32>} : memref<16x24xf32, #tpu.memory_space<vmem>>, vector<16x8xf32>,
    %c0_62 = arith.constant 0 : index
    %c0_63 = arith.constant 0 : index
    %57 = vector.load %arg19[%c0_62, %c0_63] : memref<16x24xf32, #tpu.memory_space<vmem>>, vector<16x24xf32>
    %cst_64 = arith.constant dense<0.000000e+00> : vector<16x8xf32>
    %58 = tpu.matmul %57, %37, %cst_64 {dimension_numbers = #tpu.dot_dimension_numbers<[1], [0], [0], [1], [0, 0, 1, 1], [], []>} : vector<16x24xf32>, vector<24x8xf32>, vector<16x8xf32> -> vector<16x8xf32>
    %59 = vector.broadcast %38 : vector<1x8xf32> to vector<16x8xf32>
    %60 = arith.addf %58, %59 : vector<16x8xf32>
    %61 = arith.addf %60, %34 : vector<16x8xf32>
    %62 = math.tanh %61 : vector<16x8xf32>
    %c0_65 = arith.constant 0 : index
    %c0_66 = arith.constant 0 : index
    %63 = vector.load %arg12[%c0_65, %c0_66] : memref<24x4xf32, #tpu.memory_space<vmem>>, vector<24x4xf32>
    %c0_67 = arith.constant 0 : index
    %c0_68 = arith.constant 0 : index
    %64 = vector.load %arg13[%c0_67, %c0_68] : memref<1x4xf32, #tpu.memory_space<vmem>>, vector<1x4xf32>
    %c0_69 = arith.constant 0 : index
    %c0_70 = arith.constant 0 : index
    %65 = vector.load %arg14[%c0_69, %c0_70] : memref<12x4xf32, #tpu.memory_space<vmem>>, vector<12x4xf32>
    %c0_71 = arith.constant 0 : index
    %c0_72 = arith.constant 0 : index
    %66 = vector.load %arg15[%c0_71, %c0_72] : memref<1x4xf32, #tpu.memory_space<vmem>>, vector<1x4xf32>
    %cst_73 = arith.constant 0.000000e+00 : f32
    %67 = vector.broadcast %cst_73 : f32 to vector<16x24xf32>
    %c0_74 = arith.constant 0 : index
    %c0_75 = arith.constant 0 : index
    %68 = vector.load %arg19[%c0_74, %c0_75] : memref<16x24xf32, #tpu.memory_space<vmem>>, vector<16x24xf32>
    tpu.vector_store %arg19[%c0_74, %c0_75], %67 {strides = array<i32>} : memref<16x24xf32, #tpu.memory_space<vmem>>, vector<16x24xf32>,
    %69 = vector.extract_strided_slice %62 {offsets = [0, 0], sizes = [8, 8], strides = [1, 1]} : vector<16x8xf32> to vector<8x8xf32>
    %c8_76 = arith.constant 8 : index
    %c0_77 = arith.constant 0 : index
    %70 = vector.load %arg19[%c8_76, %c0_77] : memref<16x24xf32, #tpu.memory_space<vmem>>, vector<8x8xf32>
    tpu.vector_store %arg19[%c8_76, %c0_77], %69 {strides = array<i32>} : memref<16x24xf32, #tpu.memory_space<vmem>>, vector<8x8xf32>,
    %71 = vector.extract_strided_slice %62 {offsets = [0, 0], sizes = [12, 8], strides = [1, 1]} : vector<16x8xf32> to vector<12x8xf32>
    %c4_78 = arith.constant 4 : index
    %c8_79 = arith.constant 8 : index
    %72 = vector.load %arg19[%c4_78, %c8_79] : memref<16x24xf32, #tpu.memory_space<vmem>>, vector<12x8xf32>
    tpu.vector_store %arg19[%c4_78, %c8_79], %71 {strides = array<i32>} : memref<16x24xf32, #tpu.memory_space<vmem>>, vector<12x8xf32>,
    %c0_80 = arith.constant 0 : index
    %c16_81 = arith.constant 16 : index
    %73 = vector.load %arg19[%c0_80, %c16_81] : memref<16x24xf32, #tpu.memory_space<vmem>>, vector<16x8xf32>
    tpu.vector_store %arg19[%c0_80, %c16_81], %62 {strides = array<i32>} : memref<16x24xf32, #tpu.memory_space<vmem>>, vector<16x8xf32>,
    %c0_82 = arith.constant 0 : index
    %c0_83 = arith.constant 0 : index
    %74 = vector.load %arg19[%c0_82, %c0_83] : memref<16x24xf32, #tpu.memory_space<vmem>>, vector<16x24xf32>
    %cst_84 = arith.constant dense<0.000000e+00> : vector<16x4xf32>
    %75 = tpu.matmul %74, %63, %cst_84 {dimension_numbers = #tpu.dot_dimension_numbers<[1], [0], [0], [1], [0, 0, 1, 1], [], []>} : vector<16x24xf32>, vector<24x4xf32>, vector<16x4xf32> -> vector<16x4xf32>
    %76 = vector.broadcast %64 : vector<1x4xf32> to vector<16x4xf32>
    %77 = arith.addf %75, %76 : vector<16x4xf32>
    %cst_85 = arith.constant 0.000000e+00 : f32
    %78 = vector.broadcast %cst_85 : f32 to vector<16x24xf32>
    %c0_86 = arith.constant 0 : index
    %c0_87 = arith.constant 0 : index
    %79 = vector.load %arg19[%c0_86, %c0_87] : memref<16x24xf32, #tpu.memory_space<vmem>>, vector<16x24xf32>
    tpu.vector_store %arg19[%c0_86, %c0_87], %78 {strides = array<i32>} : memref<16x24xf32, #tpu.memory_space<vmem>>, vector<16x24xf32>,
    %80 = vector.extract_strided_slice %77 {offsets = [0, 0], sizes = [8, 4], strides = [1, 1]} : vector<16x4xf32> to vector<8x4xf32>
    %c8_88 = arith.constant 8 : index
    %c0_89 = arith.constant 0 : index
    %81 = vector.load %arg19[%c8_88, %c0_89] : memref<16x24xf32, #tpu.memory_space<vmem>>, vector<8x4xf32>
    tpu.vector_store %arg19[%c8_88, %c0_89], %80 {strides = array<i32>} : memref<16x24xf32, #tpu.memory_space<vmem>>, vector<8x4xf32>,
    %82 = vector.extract_strided_slice %77 {offsets = [0, 0], sizes = [12, 4], strides = [1, 1]} : vector<16x4xf32> to vector<12x4xf32>
    %c4_90 = arith.constant 4 : index
    %c4_91 = arith.constant 4 : index
    %83 = vector.load %arg19[%c4_90, %c4_91] : memref<16x24xf32, #tpu.memory_space<vmem>>, vector<12x4xf32>
    tpu.vector_store %arg19[%c4_90, %c4_91], %82 {strides = array<i32>} : memref<16x24xf32, #tpu.memory_space<vmem>>, vector<12x4xf32>,
    %c0_92 = arith.constant 0 : index
    %c8_93 = arith.constant 8 : index
    %84 = vector.load %arg19[%c0_92, %c8_93] : memref<16x24xf32, #tpu.memory_space<vmem>>, vector<16x4xf32>
    tpu.vector_store %arg19[%c0_92, %c8_93], %77 {strides = array<i32>} : memref<16x24xf32, #tpu.memory_space<vmem>>, vector<16x4xf32>,
    %c0_94 = arith.constant 0 : index
    %c0_95 = arith.constant 0 : index
    %85 = vector.load %arg19[%c0_94, %c0_95] : memref<16x24xf32, #tpu.memory_space<vmem>>, vector<16x12xf32>
    %cst_96 = arith.constant dense<0.000000e+00> : vector<16x4xf32>
    %86 = tpu.matmul %85, %65, %cst_96 {dimension_numbers = #tpu.dot_dimension_numbers<[1], [0], [0], [1], [0, 0, 1, 1], [], []>} : vector<16x12xf32>, vector<12x4xf32>, vector<16x4xf32> -> vector<16x4xf32>
    %87 = vector.broadcast %66 : vector<1x4xf32> to vector<16x4xf32>
    %88 = arith.addf %86, %87 : vector<16x4xf32>
    %c0_97 = arith.constant 0 : index
    %c0_98 = arith.constant 0 : index
    %89 = vector.load %arg16[%c0_97, %c0_98] : memref<8x4xf32, #tpu.memory_space<vmem>>, vector<8x4xf32>
    %c0_99 = arith.constant 0 : index
    %c0_100 = arith.constant 0 : index
    %90 = vector.load %arg17[%c0_99, %c0_100] : memref<1x4xf32, #tpu.memory_space<vmem>>, vector<1x4xf32>
    %cst_101 = arith.constant dense<0.000000e+00> : vector<16x4xf32>
    %91 = tpu.matmul %62, %89, %cst_101 {dimension_numbers = #tpu.dot_dimension_numbers<[1], [0], [0], [1], [0, 0, 1, 1], [], []>} : vector<16x8xf32>, vector<8x4xf32>, vector<16x4xf32> -> vector<16x4xf32>
    %92 = vector.broadcast %90 : vector<1x4xf32> to vector<16x4xf32>
    %93 = arith.addf %91, %92 : vector<16x4xf32>
    %94 = arith.addf %88, %93 : vector<16x4xf32>
    %95 = math.tanh %94 : vector<16x4xf32>
    %c0_102 = arith.constant 0 : index
    %c0_103 = arith.constant 0 : index
    %c0_104 = arith.constant 0 : index
    %96 = vector.load %arg18[%c0_102, %c0_103, %c0_104] : memref<1x16x4xf32, #tpu.memory_space<vmem>>, vector<1x16x4xf32>
    %97 = vector.shape_cast %96 : vector<1x16x4xf32> to vector<16x4xf32>
    %98 = vector.shape_cast %95 : vector<16x4xf32> to vector<1x16x4xf32>
    tpu.vector_store %arg18[%c0_102, %c0_103, %c0_104], %98 {strides = array<i32>} : memref<1x16x4xf32, #tpu.memory_space<vmem>>, vector<1x16x4xf32>,
    return
  }
  func.func @transform_0(%arg0: i32) -> (i32, i32, i32) {
    %c0_i32 = arith.constant 0 : i32
    %c0_i32_0 = arith.constant 0 : i32
    %c0_i32_1 = arith.constant 0 : i32
    return %arg0, %c0_i32, %c0_i32_0 : i32, i32, i32
  }
  func.func @transform_1(%arg0: i32) -> (i32, i32) {
    %c0_i32 = arith.constant 0 : i32
    %c0_i32_0 = arith.constant 0 : i32
    %c0_i32_1 = arith.constant 0 : i32
    return %c0_i32, %c0_i32_0 : i32, i32
  }
  func.func @transform_2(%arg0: i32) -> (i32, i32) {
    %c0_i32 = arith.constant 0 : i32
    %c0_i32_0 = arith.constant 0 : i32
    %c0_i32_1 = arith.constant 0 : i32
    return %c0_i32, %c0_i32_0 : i32, i32
  }
  func.func @transform_3(%arg0: i32) -> (i32, i32) {
    %c0_i32 = arith.constant 0 : i32
    %c0_i32_0 = arith.constant 0 : i32
    %c0_i32_1 = arith.constant 0 : i32
    return %c0_i32, %c0_i32_0 : i32, i32
  }
  func.func @transform_4(%arg0: i32) -> (i32, i32) {
    %c0_i32 = arith.constant 0 : i32
    %c0_i32_0 = arith.constant 0 : i32
    %c0_i32_1 = arith.constant 0 : i32
    return %c0_i32, %c0_i32_0 : i32, i32
  }
  func.func @transform_5(%arg0: i32) -> (i32, i32) {
    %c0_i32 = arith.constant 0 : i32
    %c0_i32_0 = arith.constant 0 : i32
    %c0_i32_1 = arith.constant 0 : i32
    return %c0_i32, %c0_i32_0 : i32, i32
  }
  func.func @transform_6(%arg0: i32) -> (i32, i32) {
    %c0_i32 = arith.constant 0 : i32
    %c0_i32_0 = arith.constant 0 : i32
    %c0_i32_1 = arith.constant 0 : i32
    return %c0_i32, %c0_i32_0 : i32, i32
  }
  func.func @transform_7(%arg0: i32) -> (i32, i32) {
    %c0_i32 = arith.constant 0 : i32
    %c0_i32_0 = arith.constant 0 : i32
    %c0_i32_1 = arith.constant 0 : i32
    return %c0_i32, %c0_i32_0 : i32, i32
  }
  func.func @transform_8(%arg0: i32) -> (i32, i32) {
    %c0_i32 = arith.constant 0 : i32
    %c0_i32_0 = arith.constant 0 : i32
    %c0_i32_1 = arith.constant 0 : i32
    return %c0_i32, %c0_i32_0 : i32, i32
  }
  func.func @transform_9(%arg0: i32) -> (i32, i32) {
    %c0_i32 = arith.constant 0 : i32
    %c0_i32_0 = arith.constant 0 : i32
    %c0_i32_1 = arith.constant 0 : i32
    return %c0_i32, %c0_i32_0 : i32, i32
  }
  func.func @transform_10(%arg0: i32) -> (i32, i32) {
    %c0_i32 = arith.constant 0 : i32
    %c0_i32_0 = arith.constant 0 : i32
    %c0_i32_1 = arith.constant 0 : i32
    return %c0_i32, %c0_i32_0 : i32, i32
  }
  func.func @transform_11(%arg0: i32) -> (i32, i32) {
    %c0_i32 = arith.constant 0 : i32
    %c0_i32_0 = arith.constant 0 : i32
    %c0_i32_1 = arith.constant 0 : i32
    return %c0_i32, %c0_i32_0 : i32, i32
  }
  func.func @transform_12(%arg0: i32) -> (i32, i32) {
    %c0_i32 = arith.constant 0 : i32
    %c0_i32_0 = arith.constant 0 : i32
    %c0_i32_1 = arith.constant 0 : i32
    return %c0_i32, %c0_i32_0 : i32, i32
  }
  func.func @transform_13(%arg0: i32) -> (i32, i32) {
    %c0_i32 = arith.constant 0 : i32
    %c0_i32_0 = arith.constant 0 : i32
    %c0_i32_1 = arith.constant 0 : i32
    return %c0_i32, %c0_i32_0 : i32, i32
  }
  func.func @transform_14(%arg0: i32) -> (i32, i32) {
    %c0_i32 = arith.constant 0 : i32
    %c0_i32_0 = arith.constant 0 : i32
    %c0_i32_1 = arith.constant 0 : i32
    return %c0_i32, %c0_i32_0 : i32, i32
  }
  func.func @transform_15(%arg0: i32) -> (i32, i32) {
    %c0_i32 = arith.constant 0 : i32
    %c0_i32_0 = arith.constant 0 : i32
    %c0_i32_1 = arith.constant 0 : i32
    return %c0_i32, %c0_i32_0 : i32, i32
  }
  func.func @transform_16(%arg0: i32) -> (i32, i32) {
    %c0_i32 = arith.constant 0 : i32
    %c0_i32_0 = arith.constant 0 : i32
    %c0_i32_1 = arith.constant 0 : i32
    return %c0_i32, %c0_i32_0 : i32, i32
  }
  func.func @transform_17(%arg0: i32) -> (i32, i32, i32) {
    %c0_i32 = arith.constant 0 : i32
    %c0_i32_0 = arith.constant 0 : i32
    %c0_i32_1 = arith.constant 0 : i32
    return %arg0, %c0_i32, %c0_i32_0 : i32, i32, i32
  }
}

</mosaic_0001>

<llo_original>
// kernel: tpu_custom_call.1
$region0: #{tpu_custom_call.1}
  #allocation0 [shape = 'u32[]', space=smem, size = 0x4, offset = 0x4, fixed_abs, tag = 'smem constant byte address 0x4 - core index']
  #allocation1 [shape = 'u32[144,128]{1,0:T(1,128)}', space=vmem, size = 0x12000, scoped, tag = 'internal scratch']
  #allocation2 [shape = 'f32[16,24]{1,0:T(8,128)}', space=vmem, size = 0x2000, scoped, tag = 'scratch operand']
  %s0 = inlined_call_operand.vmem [shape: f32[2,16,4], index: 0, kind: input, shape index: {}]
  %s1 = inlined_call_operand.vmem [shape: f32[12,8], index: 1, kind: input, shape index: {}]
  %s2 = inlined_call_operand.vmem [shape: f32[1,8], index: 2, kind: input, shape index: {}]
  %s3 = inlined_call_operand.vmem [shape: f32[24,8], index: 3, kind: input, shape index: {}]
  %s4 = inlined_call_operand.vmem [shape: f32[1,8], index: 4, kind: input, shape index: {}]
  %s5 = inlined_call_operand.vmem [shape: f32[4,8], index: 5, kind: input, shape index: {}]
  %s6 = inlined_call_operand.vmem [shape: f32[1,8], index: 6, kind: input, shape index: {}]
  %s7 = inlined_call_operand.vmem [shape: f32[24,8], index: 7, kind: input, shape index: {}]
  %s8 = inlined_call_operand.vmem [shape: f32[1,8], index: 8, kind: input, shape index: {}]
  %s9 = inlined_call_operand.vmem [shape: f32[24,8], index: 9, kind: input, shape index: {}]
  %s10 = inlined_call_operand.vmem [shape: f32[1,8], index: 10, kind: input, shape index: {}]
  %s11 = inlined_call_operand.vmem [shape: f32[24,4], index: 11, kind: input, shape index: {}]
  %s12 = inlined_call_operand.vmem [shape: f32[1,4], index: 12, kind: input, shape index: {}]
  %s13 = inlined_call_operand.vmem [shape: f32[12,4], index: 13, kind: input, shape index: {}]
  %s14 = inlined_call_operand.vmem [shape: f32[1,4], index: 14, kind: input, shape index: {}]
  %s15 = inlined_call_operand.vmem [shape: f32[8,4], index: 15, kind: input, shape index: {}]
  %s16 = inlined_call_operand.vmem [shape: f32[1,4], index: 16, kind: input, shape index: {}]
  %s17 = inlined_call_operand.vmem [shape: f32[2,16,4], index: 17, kind: output, shape index: {}]
  %s18 = sld [smem:[#allocation0]]
  $region101: #{tpu_custom_call.1} parent=0
    _
  %s20 = ssub.s32 1, %s18
  %s21 = scalar_select 0, %s20, %s18
  loop: start=0, step=1, limit=4
  $region2: #{tpu_custom_call.1} parent=0 // loop_pre_header
    _
  $region3: #{tpu_custom_call.1} parent=0 // loop_header
    %s23 = sphi 0, %s27
    %p24 = scmp.ge.s32.totalorder %s23, 4
    %s33 = sphi 0, %s35
    %s36 = sphi 0, %s33
    %s37 = sphi 0, %s36
    %s53 = sphi 0, %s37
    %s57 = sphi 0, %s57
    %s59 = sphi 0, %s57
    %s60 = sphi 0, %s59
    %s74 = sphi 0, %s60
    %s78 = sphi 0, %s78
    %s80 = sphi 0, %s78
    %s81 = sphi 0, %s80
    %s95 = sphi 0, %s81
    %s99 = sphi 0, %s99
    %s101 = sphi 0, %s99
    %s102 = sphi 0, %s101
    %s116 = sphi 0, %s102
    %s120 = sphi 0, %s120
    %s122 = sphi 0, %s120
    %s123 = sphi 0, %s122
    %s137 = sphi 0, %s123
    %s141 = sphi 0, %s141
    %s143 = sphi 0, %s141
    %s144 = sphi 0, %s143
    %s158 = sphi 0, %s144
    %s162 = sphi 0, %s162
    %s164 = sphi 0, %s162
    %s165 = sphi 0, %s164
    %s179 = sphi 0, %s165
    %s183 = sphi 0, %s183
    %s185 = sphi 0, %s183
    %s186 = sphi 0, %s185
    %s200 = sphi 0, %s186
    %s204 = sphi 0, %s204
    %s206 = sphi 0, %s204
    %s207 = sphi 0, %s206
    %s221 = sphi 0, %s207
    %s225 = sphi 0, %s225
    %s227 = sphi 0, %s225
    %s228 = sphi 0, %s227
    %s242 = sphi 0, %s228
    %s246 = sphi 0, %s246
    %s248 = sphi 0, %s246
    %s249 = sphi 0, %s248
    %s263 = sphi 0, %s249
    %s267 = sphi 0, %s267
    %s269 = sphi 0, %s267
    %s270 = sphi 0, %s269
    %s284 = sphi 0, %s270
    %s288 = sphi 0, %s288
    %s290 = sphi 0, %s288
    %s291 = sphi 0, %s290
    %s305 = sphi 0, %s291
    %s309 = sphi 0, %s309
    %s311 = sphi 0, %s309
    %s312 = sphi 0, %s311
    %s326 = sphi 0, %s312
    %s330 = sphi 0, %s330
    %s332 = sphi 0, %s330
    %s333 = sphi 0, %s332
    %s347 = sphi 0, %s333
    %s351 = sphi 0, %s351
    %s353 = sphi 0, %s351
    %s354 = sphi 0, %s353
    %s368 = sphi 0, %s354
    %s372 = sphi 0, %s372
    %s374 = sphi 0, %s372
    %s375 = sphi 0, %s374
    %s389 = sphi 0, %s375
    %s395 = sphi 0, %s397
    %s398 = sphi 0, %s395
    %s399 = sphi 0, %s398
    %s415 = sphi 0, %s399
  $region4: #{tpu_custom_call.1} parent=0 // loop_header_branch
    %26 = sbr.rel (%p24) target = $region8
  $region5: #{tpu_custom_call.1} parent=0 // loop_body
    %s28 = ssub.s32 %s23, 1
    %s29 = ssub.s32 %s23, 2
    %s30 = sadd.s32 %s23, 1
    %s31 = ssub.s32 %s23, %s30
    %p32 = scmp.eq.s32.totalorder %s31, 0
    %s34 = sadd.s32 %s33, 1
    %s35 = scalar_select %p32, %s33, %s34
    %p38 = pneg %p32
    %p39 = scmp.eq.s32.totalorder %s23, 1
    %p40 = por %p38, %p39
    %p41 = scmp.ne.s32.totalorder %s33, %s36
    %p42 = scmp.eq.s32.totalorder %s23, 0
    %p43 = por %p41, %p42
    %p44 = scmp.ne.s32.totalorder %s33, %s36
    %p45 = scmp.eq.s32.totalorder %s28, 1
    %p46 = por %p44, %p45
    %p47 = scmp.ne.s32.totalorder %s36, %s37
    %p48 = scmp.eq.s32.totalorder %s28, 0
    %p49 = por %p47, %p48
    %p50 = scmp.ne.s32.totalorder %s36, %s37
    %p51 = scmp.eq.s32.totalorder %s29, 1
    %p52 = por %p50, %p51
    %p54 = scmp.ne.s32.totalorder %s37, %s53
    %p55 = scmp.eq.s32.totalorder %s29, 0
    %p56 = por %p54, %p55
    %s58 = sadd.s32 %s57, 1
    %p61 = scmp.eq.s32.totalorder %s23, 1
    %p62 = scmp.ne.s32.totalorder %s57, %s59
    %p63 = scmp.eq.s32.totalorder %s23, 0
    %p64 = por %p62, %p63
    %p65 = scmp.ne.s32.totalorder %s57, %s59
    %p66 = scmp.eq.s32.totalorder %s28, 1
    %p67 = por %p65, %p66
    %p68 = scmp.ne.s32.totalorder %s59, %s60
    %p69 = scmp.eq.s32.totalorder %s28, 0
    %p70 = por %p68, %p69
    %p71 = scmp.ne.s32.totalorder %s59, %s60
    %p72 = scmp.eq.s32.totalorder %s29, 1
    %p73 = por %p71, %p72
    %p75 = scmp.ne.s32.totalorder %s60, %s74
    %p76 = scmp.eq.s32.totalorder %s29, 0
    %p77 = por %p75, %p76
    %s79 = sadd.s32 %s78, 1
    %p82 = scmp.eq.s32.totalorder %s23, 1
    %p83 = scmp.ne.s32.totalorder %s78, %s80
    %p84 = scmp.eq.s32.totalorder %s23, 0
    %p85 = por %p83, %p84
    %p86 = scmp.ne.s32.totalorder %s78, %s80
    %p87 = scmp.eq.s32.totalorder %s28, 1
    %p88 = por %p86, %p87
    %p89 = scmp.ne.s32.totalorder %s80, %s81
    %p90 = scmp.eq.s32.totalorder %s28, 0
    %p91 = por %p89, %p90
    %p92 = scmp.ne.s32.totalorder %s80, %s81
    %p93 = scmp.eq.s32.totalorder %s29, 1
    %p94 = por %p92, %p93
    %p96 = scmp.ne.s32.totalorder %s81, %s95
    %p97 = scmp.eq.s32.totalorder %s29, 0
    %p98 = por %p96, %p97
    %s100 = sadd.s32 %s99, 1
    %p103 = scmp.eq.s32.totalorder %s23, 1
    %p104 = scmp.ne.s32.totalorder %s99, %s101
    %p105 = scmp.eq.s32.totalorder %s23, 0
    %p106 = por %p104, %p105
    %p107 = scmp.ne.s32.totalorder %s99, %s101
    %p108 = scmp.eq.s32.totalorder %s28, 1
    %p109 = por %p107, %p108
    %p110 = scmp.ne.s32.totalorder %s101, %s102
    %p111 = scmp.eq.s32.totalorder %s28, 0
    %p112 = por %p110, %p111
    %p113 = scmp.ne.s32.totalorder %s101, %s102
    %p114 = scmp.eq.s32.totalorder %s29, 1
    %p115 = por %p113, %p114
    %p117 = scmp.ne.s32.totalorder %s102, %s116
    %p118 = scmp.eq.s32.totalorder %s29, 0
    %p119 = por %p117, %p118
    %s121 = sadd.s32 %s120, 1
    %p124 = scmp.eq.s32.totalorder %s23, 1
    %p125 = scmp.ne.s32.totalorder %s120, %s122
    %p126 = scmp.eq.s32.totalorder %s23, 0
    %p127 = por %p125, %p126
    %p128 = scmp.ne.s32.totalorder %s120, %s122
    %p129 = scmp.eq.s32.totalorder %s28, 1
    %p130 = por %p128, %p129
    %p131 = scmp.ne.s32.totalorder %s122, %s123
    %p132 = scmp.eq.s32.totalorder %s28, 0
    %p133 = por %p131, %p132
    %p134 = scmp.ne.s32.totalorder %s122, %s123
    %p135 = scmp.eq.s32.totalorder %s29, 1
    %p136 = por %p134, %p135
    %p138 = scmp.ne.s32.totalorder %s123, %s137
    %p139 = scmp.eq.s32.totalorder %s29, 0
    %p140 = por %p138, %p139
    %s142 = sadd.s32 %s141, 1
    %p145 = scmp.eq.s32.totalorder %s23, 1
    %p146 = scmp.ne.s32.totalorder %s141, %s143
    %p147 = scmp.eq.s32.totalorder %s23, 0
    %p148 = por %p146, %p147
    %p149 = scmp.ne.s32.totalorder %s141, %s143
    %p150 = scmp.eq.s32.totalorder %s28, 1
    %p151 = por %p149, %p150
    %p152 = scmp.ne.s32.totalorder %s143, %s144
    %p153 = scmp.eq.s32.totalorder %s28, 0
    %p154 = por %p152, %p153
    %p155 = scmp.ne.s32.totalorder %s143, %s144
    %p156 = scmp.eq.s32.totalorder %s29, 1
    %p157 = por %p155, %p156
    %p159 = scmp.ne.s32.totalorder %s144, %s158
    %p160 = scmp.eq.s32.totalorder %s29, 0
    %p161 = por %p159, %p160
    %s163 = sadd.s32 %s162, 1
    %p166 = scmp.eq.s32.totalorder %s23, 1
    %p167 = scmp.ne.s32.totalorder %s162, %s164
    %p168 = scmp.eq.s32.totalorder %s23, 0
    %p169 = por %p167, %p168
    %p170 = scmp.ne.s32.totalorder %s162, %s164
    %p171 = scmp.eq.s32.totalorder %s28, 1
    %p172 = por %p170, %p171
    %p173 = scmp.ne.s32.totalorder %s164, %s165
    %p174 = scmp.eq.s32.totalorder %s28, 0
    %p175 = por %p173, %p174
    %p176 = scmp.ne.s32.totalorder %s164, %s165
    %p177 = scmp.eq.s32.totalorder %s29, 1
    %p178 = por %p176, %p177
    %p180 = scmp.ne.s32.totalorder %s165, %s179
    %p181 = scmp.eq.s32.totalorder %s29, 0
    %p182 = por %p180, %p181
    %s184 = sadd.s32 %s183, 1
    %p187 = scmp.eq.s32.totalorder %s23, 1
    %p188 = scmp.ne.s32.totalorder %s183, %s185
    %p189 = scmp.eq.s32.totalorder %s23, 0
    %p190 = por %p188, %p189
    %p191 = scmp.ne.s32.totalorder %s183, %s185
    %p192 = scmp.eq.s32.totalorder %s28, 1
    %p193 = por %p191, %p192
    %p194 = scmp.ne.s32.totalorder %s185, %s186
    %p195 = scmp.eq.s32.totalorder %s28, 0
    %p196 = por %p194, %p195
    %p197 = scmp.ne.s32.totalorder %s185, %s186
    %p198 = scmp.eq.s32.totalorder %s29, 1
    %p199 = por %p197, %p198
    %p201 = scmp.ne.s32.totalorder %s186, %s200
    %p202 = scmp.eq.s32.totalorder %s29, 0
    %p203 = por %p201, %p202
    %s205 = sadd.s32 %s204, 1
    %p208 = scmp.eq.s32.totalorder %s23, 1
    %p209 = scmp.ne.s32.totalorder %s204, %s206
    %p210 = scmp.eq.s32.totalorder %s23, 0
    %p211 = por %p209, %p210
    %p212 = scmp.ne.s32.totalorder %s204, %s206
    %p213 = scmp.eq.s32.totalorder %s28, 1
    %p214 = por %p212, %p213
    %p215 = scmp.ne.s32.totalorder %s206, %s207
    %p216 = scmp.eq.s32.totalorder %s28, 0
    %p217 = por %p215, %p216
    %p218 = scmp.ne.s32.totalorder %s206, %s207
    %p219 = scmp.eq.s32.totalorder %s29, 1
    %p220 = por %p218, %p219
    %p222 = scmp.ne.s32.totalorder %s207, %s221
    %p223 = scmp.eq.s32.totalorder %s29, 0
    %p224 = por %p222, %p223
    %s226 = sadd.s32 %s225, 1
    %p229 = scmp.eq.s32.totalorder %s23, 1
    %p230 = scmp.ne.s32.totalorder %s225, %s227
    %p231 = scmp.eq.s32.totalorder %s23, 0
    %p232 = por %p230, %p231
    %p233 = scmp.ne.s32.totalorder %s225, %s227
    %p234 = scmp.eq.s32.totalorder %s28, 1
    %p235 = por %p233, %p234
    %p236 = scmp.ne.s32.totalorder %s227, %s228
    %p237 = scmp.eq.s32.totalorder %s28, 0
    %p238 = por %p236, %p237
    %p239 = scmp.ne.s32.totalorder %s227, %s228
    %p240 = scmp.eq.s32.totalorder %s29, 1
    %p241 = por %p239, %p240
    %p243 = scmp.ne.s32.totalorder %s228, %s242
    %p244 = scmp.eq.s32.totalorder %s29, 0
    %p245 = por %p243, %p244
    %s247 = sadd.s32 %s246, 1
    %p250 = scmp.eq.s32.totalorder %s23, 1
    %p251 = scmp.ne.s32.totalorder %s246, %s248
    %p252 = scmp.eq.s32.totalorder %s23, 0
    %p253 = por %p251, %p252
    %p254 = scmp.ne.s32.totalorder %s246, %s248
    %p255 = scmp.eq.s32.totalorder %s28, 1
    %p256 = por %p254, %p255
    %p257 = scmp.ne.s32.totalorder %s248, %s249
    %p258 = scmp.eq.s32.totalorder %s28, 0
    %p259 = por %p257, %p258
    %p260 = scmp.ne.s32.totalorder %s248, %s249
    %p261 = scmp.eq.s32.totalorder %s29, 1
    %p262 = por %p260, %p261
    %p264 = scmp.ne.s32.totalorder %s249, %s263
    %p265 = scmp.eq.s32.totalorder %s29, 0
    %p266 = por %p264, %p265
    %s268 = sadd.s32 %s267, 1
    %p271 = scmp.eq.s32.totalorder %s23, 1
    %p272 = scmp.ne.s32.totalorder %s267, %s269
    %p273 = scmp.eq.s32.totalorder %s23, 0
    %p274 = por %p272, %p273
    %p275 = scmp.ne.s32.totalorder %s267, %s269
    %p276 = scmp.eq.s32.totalorder %s28, 1
    %p277 = por %p275, %p276
    %p278 = scmp.ne.s32.totalorder %s269, %s270
    %p279 = scmp.eq.s32.totalorder %s28, 0
    %p280 = por %p278, %p279
    %p281 = scmp.ne.s32.totalorder %s269, %s270
    %p282 = scmp.eq.s32.totalorder %s29, 1
    %p283 = por %p281, %p282
    %p285 = scmp.ne.s32.totalorder %s270, %s284
    %p286 = scmp.eq.s32.totalorder %s29, 0
    %p287 = por %p285, %p286
    %s289 = sadd.s32 %s288, 1
    %p292 = scmp.eq.s32.totalorder %s23, 1
    %p293 = scmp.ne.s32.totalorder %s288, %s290
    %p294 = scmp.eq.s32.totalorder %s23, 0
    %p295 = por %p293, %p294
    %p296 = scmp.ne.s32.totalorder %s288, %s290
    %p297 = scmp.eq.s32.totalorder %s28, 1
    %p298 = por %p296, %p297
    %p299 = scmp.ne.s32.totalorder %s290, %s291
    %p300 = scmp.eq.s32.totalorder %s28, 0
    %p301 = por %p299, %p300
    %p302 = scmp.ne.s32.totalorder %s290, %s291
    %p303 = scmp.eq.s32.totalorder %s29, 1
    %p304 = por %p302, %p303
    %p306 = scmp.ne.s32.totalorder %s291, %s305
    %p307 = scmp.eq.s32.totalorder %s29, 0
    %p308 = por %p306, %p307
    %s310 = sadd.s32 %s309, 1
    %p313 = scmp.eq.s32.totalorder %s23, 1
    %p314 = scmp.ne.s32.totalorder %s309, %s311
    %p315 = scmp.eq.s32.totalorder %s23, 0
    %p316 = por %p314, %p315
    %p317 = scmp.ne.s32.totalorder %s309, %s311
    %p318 = scmp.eq.s32.totalorder %s28, 1
    %p319 = por %p317, %p318
    %p320 = scmp.ne.s32.totalorder %s311, %s312
    %p321 = scmp.eq.s32.totalorder %s28, 0
    %p322 = por %p320, %p321
    %p323 = scmp.ne.s32.totalorder %s311, %s312
    %p324 = scmp.eq.s32.totalorder %s29, 1
    %p325 = por %p323, %p324
    %p327 = scmp.ne.s32.totalorder %s312, %s326
    %p328 = scmp.eq.s32.totalorder %s29, 0
    %p329 = por %p327, %p328
    %s331 = sadd.s32 %s330, 1
    %p334 = scmp.eq.s32.totalorder %s23, 1
    %p335 = scmp.ne.s32.totalorder %s330, %s332
    %p336 = scmp.eq.s32.totalorder %s23, 0
    %p337 = por %p335, %p336
    %p338 = scmp.ne.s32.totalorder %s330, %s332
    %p339 = scmp.eq.s32.totalorder %s28, 1
    %p340 = por %p338, %p339
    %p341 = scmp.ne.s32.totalorder %s332, %s333
    %p342 = scmp.eq.s32.totalorder %s28, 0
    %p343 = por %p341, %p342
    %p344 = scmp.ne.s32.totalorder %s332, %s333
    %p345 = scmp.eq.s32.totalorder %s29, 1
    %p346 = por %p344, %p345
    %p348 = scmp.ne.s32.totalorder %s333, %s347
    %p349 = scmp.eq.s32.totalorder %s29, 0
    %p350 = por %p348, %p349
    %s352 = sadd.s32 %s351, 1
    %p355 = scmp.eq.s32.totalorder %s23, 1
    %p356 = scmp.ne.s32.totalorder %s351, %s353
    %p357 = scmp.eq.s32.totalorder %s23, 0
    %p358 = por %p356, %p357
    %p359 = scmp.ne.s32.totalorder %s351, %s353
    %p360 = scmp.eq.s32.totalorder %s28, 1
    %p361 = por %p359, %p360
    %p362 = scmp.ne.s32.totalorder %s353, %s354
    %p363 = scmp.eq.s32.totalorder %s28, 0
    %p364 = por %p362, %p363
    %p365 = scmp.ne.s32.totalorder %s353, %s354
    %p366 = scmp.eq.s32.totalorder %s29, 1
    %p367 = por %p365, %p366
    %p369 = scmp.ne.s32.totalorder %s354, %s368
    %p370 = scmp.eq.s32.totalorder %s29, 0
    %p371 = por %p369, %p370
    %s373 = sadd.s32 %s372, 1
    %p376 = scmp.eq.s32.totalorder %s23, 1
    %p377 = scmp.ne.s32.totalorder %s372, %s374
    %p378 = scmp.eq.s32.totalorder %s23, 0
    %p379 = por %p377, %p378
    %p380 = scmp.ne.s32.totalorder %s372, %s374
    %p381 = scmp.eq.s32.totalorder %s28, 1
    %p382 = por %p380, %p381
    %p383 = scmp.ne.s32.totalorder %s374, %s375
    %p384 = scmp.eq.s32.totalorder %s28, 0
    %p385 = por %p383, %p384
    %p386 = scmp.ne.s32.totalorder %s374, %s375
    %p387 = scmp.eq.s32.totalorder %s29, 1
    %p388 = por %p386, %p387
    %p390 = scmp.ne.s32.totalorder %s375, %s389
    %p391 = scmp.eq.s32.totalorder %s29, 0
    %p392 = por %p390, %p391
    %s393 = ssub.s32 %s23, %s30
    %p394 = scmp.eq.s32.totalorder %s393, 0
    %s396 = sadd.s32 %s395, 1
    %s397 = scalar_select %p394, %s395, %s396
    %p400 = pneg %p394
    %p401 = scmp.eq.s32.totalorder %s23, 1
    %p402 = por %p400, %p401
    %p403 = scmp.ne.s32.totalorder %s395, %s398
    %p404 = scmp.eq.s32.totalorder %s23, 0
    %p405 = por %p403, %p404
    %p406 = scmp.ne.s32.totalorder %s395, %s398
    %p407 = scmp.eq.s32.totalorder %s28, 1
    %p408 = por %p406, %p407
    %p409 = scmp.ne.s32.totalorder %s398, %s399
    %p410 = scmp.eq.s32.totalorder %s28, 0
    %p411 = por %p409, %p410
    %p412 = scmp.ne.s32.totalorder %s398, %s399
    %p413 = scmp.eq.s32.totalorder %s29, 1
    %p414 = por %p412, %p413
    %p416 = scmp.ne.s32.totalorder %s399, %s415
    %p417 = scmp.eq.s32.totalorder %s29, 0
    %p418 = por %p416, %p417
    %p419 = scmp.le.s32.totalorder 1, %s23
    %p420 = scmp.lt.s32.totalorder %s23, 3
    %p421 = pnand %p419, %p420
    %p422 = pneg %p421
    // Predicated region
    $region9: #{tpu_custom_call.1} parent=5 // pred_check
      _
    $region10: #{tpu_custom_call.1} parent=5 // pred_check_branch
      %424 = sbr.rel (%p421) target = $region12
    $region11: #{tpu_custom_call.1} parent=5 // pred_region
      %s425 = ssub.s32 %s23, 1
      // Predicated region
      $region13: #{tpu_custom_call.1} parent=11 // pred_check
        %p426 = pneg %p70
      $region14: #{tpu_custom_call.1} parent=11 // pred_check_branch
        %428 = sbr.rel (%p426) target = $region16
      $region15: #{tpu_custom_call.1} parent=11 // pred_region
        _
      $region16: #{tpu_custom_call.1} parent=11 // pred_fallthru
        _
      // Predicated region
      $region17: #{tpu_custom_call.1} parent=11 // pred_check
        %p429 = pneg %p91
      $region18: #{tpu_custom_call.1} parent=11 // pred_check_branch
        %431 = sbr.rel (%p429) target = $region20
      $region19: #{tpu_custom_call.1} parent=11 // pred_region
        _
      $region20: #{tpu_custom_call.1} parent=11 // pred_fallthru
        _
      // Predicated region
      $region21: #{tpu_custom_call.1} parent=11 // pred_check
        %p432 = pneg %p112
      $region22: #{tpu_custom_call.1} parent=11 // pred_check_branch
        %434 = sbr.rel (%p432) target = $region24
      $region23: #{tpu_custom_call.1} parent=11 // pred_region
        _
      $region24: #{tpu_custom_call.1} parent=11 // pred_fallthru
        _
      // Predicated region
      $region25: #{tpu_custom_call.1} parent=11 // pred_check
        %p435 = pneg %p133
      $region26: #{tpu_custom_call.1} parent=11 // pred_check_branch
        %437 = sbr.rel (%p435) target = $region28
      $region27: #{tpu_custom_call.1} parent=11 // pred_region
        _
      $region28: #{tpu_custom_call.1} parent=11 // pred_fallthru
        _
      // Predicated region
      $region29: #{tpu_custom_call.1} parent=11 // pred_check
        %p438 = pneg %p154
      $region30: #{tpu_custom_call.1} parent=11 // pred_check_branch
        %440 = sbr.rel (%p438) target = $region32
      $region31: #{tpu_custom_call.1} parent=11 // pred_region
        _
      $region32: #{tpu_custom_call.1} parent=11 // pred_fallthru
        _
      // Predicated region
      $region33: #{tpu_custom_call.1} parent=11 // pred_check
        %p441 = pneg %p175
      $region34: #{tpu_custom_call.1} parent=11 // pred_check_branch
        %443 = sbr.rel (%p441) target = $region36
      $region35: #{tpu_custom_call.1} parent=11 // pred_region
        _
      $region36: #{tpu_custom_call.1} parent=11 // pred_fallthru
        _
      // Predicated region
      $region37: #{tpu_custom_call.1} parent=11 // pred_check
        %p444 = pneg %p196
      $region38: #{tpu_custom_call.1} parent=11 // pred_check_branch
        %446 = sbr.rel (%p444) target = $region40
      $region39: #{tpu_custom_call.1} parent=11 // pred_region
        _
      $region40: #{tpu_custom_call.1} parent=11 // pred_fallthru
        _
      // Predicated region
      $region41: #{tpu_custom_call.1} parent=11 // pred_check
        %p447 = pneg %p217
      $region42: #{tpu_custom_call.1} parent=11 // pred_check_branch
        %449 = sbr.rel (%p447) target = $region44
      $region43: #{tpu_custom_call.1} parent=11 // pred_region
        _
      $region44: #{tpu_custom_call.1} parent=11 // pred_fallthru
        _
      // Predicated region
      $region45: #{tpu_custom_call.1} parent=11 // pred_check
        %p450 = pneg %p238
      $region46: #{tpu_custom_call.1} parent=11 // pred_check_branch
        %452 = sbr.rel (%p450) target = $region48
      $region47: #{tpu_custom_call.1} parent=11 // pred_region
        _
      $region48: #{tpu_custom_call.1} parent=11 // pred_fallthru
        _
      // Predicated region
      $region49: #{tpu_custom_call.1} parent=11 // pred_check
        %p453 = pneg %p259
      $region50: #{tpu_custom_call.1} parent=11 // pred_check_branch
        %455 = sbr.rel (%p453) target = $region52
      $region51: #{tpu_custom_call.1} parent=11 // pred_region
        _
      $region52: #{tpu_custom_call.1} parent=11 // pred_fallthru
        _
      // Predicated region
      $region53: #{tpu_custom_call.1} parent=11 // pred_check
        %p456 = pneg %p280
      $region54: #{tpu_custom_call.1} parent=11 // pred_check_branch
        %458 = sbr.rel (%p456) target = $region56
      $region55: #{tpu_custom_call.1} parent=11 // pred_region
        _
      $region56: #{tpu_custom_call.1} parent=11 // pred_fallthru
        _
      // Predicated region
      $region57: #{tpu_custom_call.1} parent=11 // pred_check
        %p459 = pneg %p301
      $region58: #{tpu_custom_call.1} parent=11 // pred_check_branch
        %461 = sbr.rel (%p459) target = $region60
      $region59: #{tpu_custom_call.1} parent=11 // pred_region
        _
      $region60: #{tpu_custom_call.1} parent=11 // pred_fallthru
        _
      // Predicated region
      $region61: #{tpu_custom_call.1} parent=11 // pred_check
        %p462 = pneg %p322
      $region62: #{tpu_custom_call.1} parent=11 // pred_check_branch
        %464 = sbr.rel (%p462) target = $region64
      $region63: #{tpu_custom_call.1} parent=11 // pred_region
        _
      $region64: #{tpu_custom_call.1} parent=11 // pred_fallthru
        _
      // Predicated region
      $region65: #{tpu_custom_call.1} parent=11 // pred_check
        %p465 = pneg %p343
      $region66: #{tpu_custom_call.1} parent=11 // pred_check_branch
        %467 = sbr.rel (%p465) target = $region68
      $region67: #{tpu_custom_call.1} parent=11 // pred_region
        _
      $region68: #{tpu_custom_call.1} parent=11 // pred_fallthru
        _
      // Predicated region
      $region69: #{tpu_custom_call.1} parent=11 // pred_check
        %p468 = pneg %p364
      $region70: #{tpu_custom_call.1} parent=11 // pred_check_branch
        %470 = sbr.rel (%p468) target = $region72
      $region71: #{tpu_custom_call.1} parent=11 // pred_region
        _
      $region72: #{tpu_custom_call.1} parent=11 // pred_fallthru
        _
      // Predicated region
      $region73: #{tpu_custom_call.1} parent=11 // pred_check
        %p471 = pneg %p385
      $region74: #{tpu_custom_call.1} parent=11 // pred_check_branch
        %473 = sbr.rel (%p471) target = $region76
      $region75: #{tpu_custom_call.1} parent=11 // pred_region
        _
      $region76: #{tpu_custom_call.1} parent=11 // pred_fallthru
        _
    $region12: #{tpu_custom_call.1} parent=5 // pred_fallthru
      _
    %p474 = scmp.lt.s32.totalorder %s23, 2
    // Predicated region
    $region77: #{tpu_custom_call.1} parent=5 // pred_check
      %p475 = pneg %p474
    $region78: #{tpu_custom_call.1} parent=5 // pred_check_branch
      %477 = sbr.rel (%p475) target = $region80
    $region79: #{tpu_custom_call.1} parent=5 // pred_region
      // Predicated region
      $region81: #{tpu_custom_call.1} parent=79 // pred_check
        %p478 = pneg %p43
      $region82: #{tpu_custom_call.1} parent=79 // pred_check_branch
        %480 = sbr.rel (%p478) target = $region84
      $region83: #{tpu_custom_call.1} parent=79 // pred_region
        %p481 = scmp.lt.s32.totalorder %s23, 1
        %s482 = scalar_select %p481, %s23, 1
        %s483 = smul.addr %s482, 2
        %s484 = smul.addr %s483, 8
        %s485 = scalar_lea.vmem %s0, %s484
      $region84: #{tpu_custom_call.1} parent=79 // pred_fallthru
        _
    $region80: #{tpu_custom_call.1} parent=5 // pred_fallthru
      _
    %p486 = scmp.le.s32.totalorder 1, %s23
    %p487 = scmp.lt.s32.totalorder %s23, 3
    %p488 = pnand %p486, %p487
    %p489 = pneg %p488
    // Predicated region
    $region85: #{tpu_custom_call.1} parent=5 // pred_check
      _
    $region86: #{tpu_custom_call.1} parent=5 // pred_check_branch
      %491 = sbr.rel (%p488) target = $region88
    $region87: #{tpu_custom_call.1} parent=5 // pred_region
      %s492 = ssub.s32 %s23, 1
      %p493 = scmp.lt.s32.totalorder %s28, 1
      %s494 = scalar_select %p493, %s28, 1
      %s495 = smul.addr %s494, 2
      %s496 = smul.addr %s495, 8
      %s497 = scalar_lea.vmem %s0, %s496
      %p498 = pneg %p49
      %p499 = pneg %p46
      %p500 = pneg %p70
      %p501 = pneg %p67
      %p502 = pneg %p91
      %p503 = pneg %p88
      %p504 = pneg %p112
      %p505 = pneg %p109
      %p506 = pneg %p133
      %p507 = pneg %p130
      %p508 = pneg %p154
      %p509 = pneg %p151
      %p510 = pneg %p175
      %p511 = pneg %p172
      %p512 = pneg %p196
      %p513 = pneg %p193
      %p514 = pneg %p217
      %p515 = pneg %p214
      %p516 = pneg %p238
      %p517 = pneg %p235
      %p518 = pneg %p259
      %p519 = pneg %p256
      %p520 = pneg %p280
      %p521 = pneg %p277
      %p522 = pneg %p301
      %p523 = pneg %p298
      %p524 = pneg %p322
      %p525 = pneg %p319
      %p526 = pneg %p343
      %p527 = pneg %p340
      %p528 = pneg %p364
      %p529 = pneg %p361
      %p530 = pneg %p385
      %p531 = pneg %p382
      %p532 = pneg %p411
      %p533 = pneg %p408
      %p534 = scmp.lt.s32.totalorder %s28, 1
      %s535 = scalar_select %p534, %s28, 1
      %s536 = smul.addr %s535, 2
      %s537 = smul.addr %s536, 8
      %s538 = scalar_lea.vmem %s17, %s537
      %p539 = scmp.lt.s32.totalorder %s28, 1
      %s540 = scalar_select %p539, %s28, 1
      %s541 = smul.addr %s540, 2
      %s542 = smul.addr %s541, 8
      %s543 = scalar_lea.vmem %s0, %s542
      %p544 = scmp.lt.s32.totalorder %s28, 1
      %s545 = scalar_select %p544, %s28, 1
      %s546 = smul.addr %s545, 2
      %s547 = smul.addr %s546, 8
      %s548 = scalar_lea.vmem %s17, %s547
      %v549 = vld [vmem:[%s543] sm:$0xff]
      %v550 = vld [vmem:[%s543 + $0x8] sm:$0xff]
      %v551 = vld [vmem:[%s1] sm:$0xff]
      %v552 = vld [vmem:[%s1 + $0x8] sm:$0xf]
      %v553 = vld [vmem:[%s2] sm:$0x1]
      %v554 = vld [vmem:[%s3] sm:$0xff]
      %v555 = vld [vmem:[%s3 + $0x8] sm:$0xff]
      %v556 = vld [vmem:[%s3 + $0x10] sm:$0xff]
      %v557 = vld [vmem:[%s4] sm:$0x1]
      %vm558 = vcmask 195584
      %559 = vst.msk [vmem:[#allocation2] sm:$0xff] %vm558, 0.0
      %560 = vst.msk [vmem:[#allocation2 + $0x8] sm:$0xff] %vm558, 0.0
      %vm561 = vcmask 31744
      %562 = vst.msk [vmem:[#allocation2 + $0x2] sm:$0xff] %vm561, %v549
      %vm563 = vcmask 29696
      %564 = vst.msk [vmem:[#allocation2 + $0xa] sm:$0x3f] %vm563, %v550
      %567 = vrot.lane.b32.xlu0 %v549, 4
      %v568 = vpop.permute.xlu0 %567
      %569 = vrot.lane.b32.xlu0 %v550, 4
      %v570 = vpop.permute.xlu0 %569
      %vm573 = vcmask 64544
      %574 = vst.msk [vmem:[#allocation2 + $0x1] sm:$0xff] %vm573, %v568
      %vm575 = vcmask 63520
      %576 = vst.msk [vmem:[#allocation2 + $0x9] sm:$0x7f] %vm575, %v570
      %577 = vrot.lane.b32.xlu0 %v549, 8
      %v578 = vpop.permute.xlu0 %577
      %579 = vrot.lane.b32.xlu0 %v550, 8
      %v580 = vpop.permute.xlu0 %579
      %vm583 = vcmask 97344
      %584 = vst.msk [vmem:[#allocation2] sm:$0xff] %vm583, %v578
      %585 = vst.msk [vmem:[#allocation2 + $0x8] sm:$0xff] %vm583, %v580
      %v586 = vld [vmem:[#allocation2] sm:$0xff]
      %v587 = vld [vmem:[#allocation2 + $0x8] sm:$0xff]
      %v589 = vlaneseq
      %v590 = vshrl.u32 %v589, 7
      %v591 = vsub.s32 0, %v590
      %v592 = vrot.slane %v553, %v591
      %vm594 = vcmask 97280
      %v596 = vsel %vm594, %v586, 0
      %v599 = vsel %vm594, %v587, 0
      %vm601 = vcmask 1043456
      %v603 = vsel %vm601, %v552, 0
      %605 = vmatprep.subr.mxu0 0.0
      %606 = vmatpush1.msra.mxu0 %v551
      %607 = vmatprep.subr.mxu0 0.0
      %608 = vmatpush1.msra.mxu0 %v603
      %609 = vmatprep.subr.mxu0 0.0
      %610 = vmatpush1.msra.mxu0 0.0
      %611 = vmatprep.subr.mxu0 0.0
      %612 = vmatpush1.msra.mxu0 0.0
      %613 = vmatprep.subr.mxu0 0.0
      %614 = vmatpush1.msra.mxu0 0.0
      %615 = vmatprep.subr.mxu0 0.0
      %616 = vmatpush1.msra.mxu0 0.0
      %617 = vmatprep.subr.mxu0 0.0
      %618 = vmatpush1.msra.mxu0 0.0
      %619 = vmatprep.subr.mxu0 0.0
      %620 = vmatpush1.msra.mxu0 0.0
      %621 = vmatprep.subr.mxu0 0.0
      %622 = vmatpush1.msra.mxu0 0.0
      %623 = vmatprep.subr.mxu0 0.0
      %624 = vmatpush1.msra.mxu0 0.0
      %625 = vmatprep.subr.mxu0 0.0
      %626 = vmatpush1.msra.mxu0 0.0
      %627 = vmatprep.subr.mxu0 0.0
      %628 = vmatpush1.msra.mxu0 0.0
      %629 = vmatprep.subr.mxu0 0.0
      %630 = vmatpush1.msra.mxu0 0.0
      %631 = vmatprep.subr.mxu0 0.0
      %632 = vmatpush1.msra.mxu0 0.0
      %633 = vmatprep.subr.mxu0 0.0
      %634 = vmatpush1.msra.mxu0 0.0
      %635 = vmatprep.subr.mxu0 0.0
      %636 = vmatpush1.msra.mxu0 0.0
      %637 = vmatprep.subr.mxu0 0.0
      %638 = vmatpush1.msra.mxu0 0.0
      %639 = vmatprep.subr.mxu0 0.0
      %640 = vmatpush1.msra.mxu0 0.0
      %641 = vmatprep.subr.mxu0 0.0
      %642 = vmatpush1.msra.mxu0 0.0
      %643 = vmatprep.subr.mxu0 0.0
      %644 = vmatpush1.msra.mxu0 0.0
      %645 = vmatprep.subr.mxu0 0.0
      %646 = vmatpush1.msra.mxu0 0.0
      %647 = vmatprep.subr.mxu0 0.0
      %648 = vmatpush1.msra.mxu0 0.0
      %649 = vmatprep.subr.mxu0 0.0
      %650 = vmatpush1.msra.mxu0 0.0
      %651 = vmatprep.subr.mxu0 0.0
      %652 = vmatpush1.msra.mxu0 0.0
      %653 = vmatprep.subr.mxu0 0.0
      %654 = vmatpush1.msra.mxu0 0.0
      %655 = vmatprep.subr.mxu0 0.0
      %656 = vmatpush1.msra.mxu0 0.0
      %657 = vmatprep.subr.mxu0 0.0
      %658 = vmatpush1.msra.mxu0 0.0
      %659 = vmatprep.subr.mxu0 0.0
      %660 = vmatpush1.msra.mxu0 0.0
      %661 = vmatprep.subr.mxu0 0.0
      %662 = vmatpush1.msra.mxu0 0.0
      %663 = vmatprep.subr.mxu0 0.0
      %664 = vmatpush1.msra.mxu0 0.0
      %665 = vmatprep.subr.mxu0 0.0
      %666 = vmatpush1.msra.mxu0 0.0
      %667 = vmatprep.subr.mxu0 0.0
      %668 = vmatpush1.msra.mxu0 0.0
      %669 = vmatprep.mubr.f32.mxu0 0.0
      %670 = vmatmul.mubr.f32.gmra.mrb[0].mxu0 %v596
      %v671 = vpop.f32.mrb[0].mxu0
      %v672 = vadd.f32 %v592, %v671
      %v673 = vpop.f32.mrb[0].mxu0
      %674 = vmatprep.mubr.f32.mxu0 0.0
      %675 = vmatmul.mubr.f32.gmra.mrb[0].mxu0 %v599
      %v676 = vpop.f32.mrb[0].mxu0
      %v677 = vadd.f32 %v592, %v676
      %v678 = vpop.f32.mrb[0].mxu0
      %679 = vdwg.mxu0
      %680 = vst.msk [vmem:[#allocation2] sm:$0xff] %vm558, 0.0
      %681 = vst.msk [vmem:[#allocation2 + $0x8] sm:$0xff] %vm558, 0.0
      %vm682 = vcmask 64512
      %683 = vst.msk [vmem:[#allocation2 + $0x2] sm:$0xff] %vm682, %v672
      %vm684 = vcmask 62464
      %685 = vst.msk [vmem:[#allocation2 + $0xa] sm:$0x3f] %vm684, %v677
      %688 = vrot.lane.b32.xlu0 %v672, 8
      %v689 = vpop.permute.xlu0 %688
      %690 = vrot.lane.b32.xlu0 %v677, 8
      %v691 = vpop.permute.xlu0 %690
      %vm694 = vcmask 130112
      %695 = vst.msk [vmem:[#allocation2 + $0x1] sm:$0xff] %vm694, %v689
      %vm696 = vcmask 129088
      %697 = vst.msk [vmem:[#allocation2 + $0x9] sm:$0x7f] %vm696, %v691
      %698 = vrot.lane.b32.xlu0 %v672, 16
      %v699 = vpop.permute.xlu0 %698
      %700 = vrot.lane.b32.xlu0 %v677, 16
      %v701 = vpop.permute.xlu0 %700
      %vm704 = vcmask 195712
      %705 = vst.msk [vmem:[#allocation2] sm:$0xff] %vm704, %v699
      %706 = vst.msk [vmem:[#allocation2 + $0x8] sm:$0xff] %vm704, %v701
      %v707 = vld [vmem:[#allocation2] sm:$0xff]
      %v708 = vld [vmem:[#allocation2 + $0x8] sm:$0xff]
      %v710 = vlaneseq
      %v711 = vshrl.u32 %v710, 7
      %v712 = vsub.s32 0, %v711
      %v713 = vrot.slane %v557, %v712
      %v716 = vsel %vm558, %v707, 0
      %v719 = vsel %vm558, %v708, 0
      %721 = vmatprep.subr.mxu0 0.0
      %722 = vmatpush1.msra.mxu0 %v554
      %723 = vmatprep.subr.mxu0 0.0
      %724 = vmatpush1.msra.mxu0 %v555
      %725 = vmatprep.subr.mxu0 0.0
      %726 = vmatpush1.msra.mxu0 %v556
      %727 = vmatprep.subr.mxu0 0.0
      %728 = vmatpush1.msra.mxu0 0.0
      %729 = vmatprep.subr.mxu0 0.0
      %730 = vmatpush1.msra.mxu0 0.0
      %731 = vmatprep.subr.mxu0 0.0
      %732 = vmatpush1.msra.mxu0 0.0
      %733 = vmatprep.subr.mxu0 0.0
      %734 = vmatpush1.msra.mxu0 0.0
      %735 = vmatprep.subr.mxu0 0.0
      %736 = vmatpush1.msra.mxu0 0.0
      %737 = vmatprep.subr.mxu0 0.0
      %738 = vmatpush1.msra.mxu0 0.0
      %739 = vmatprep.subr.mxu0 0.0
      %740 = vmatpush1.msra.mxu0 0.0
      %741 = vmatprep.subr.mxu0 0.0
      %742 = vmatpush1.msra.mxu0 0.0
      %743 = vmatprep.subr.mxu0 0.0
      %744 = vmatpush1.msra.mxu0 0.0
      %745 = vmatprep.subr.mxu0 0.0
      %746 = vmatpush1.msra.mxu0 0.0
      %747 = vmatprep.subr.mxu0 0.0
      %748 = vmatpush1.msra.mxu0 0.0
      %749 = vmatprep.subr.mxu0 0.0
      %750 = vmatpush1.msra.mxu0 0.0
      %751 = vmatprep.subr.mxu0 0.0
      %752 = vmatpush1.msra.mxu0 0.0
      %753 = vmatprep.subr.mxu0 0.0
      %754 = vmatpush1.msra.mxu0 0.0
      %755 = vmatprep.subr.mxu0 0.0
      %756 = vmatpush1.msra.mxu0 0.0
      %757 = vmatprep.subr.mxu0 0.0
      %758 = vmatpush1.msra.mxu0 0.0
      %759 = vmatprep.subr.mxu0 0.0
      %760 = vmatpush1.msra.mxu0 0.0
      %761 = vmatprep.subr.mxu0 0.0
      %762 = vmatpush1.msra.mxu0 0.0
      %763 = vmatprep.subr.mxu0 0.0
      %764 = vmatpush1.msra.mxu0 0.0
      %765 = vmatprep.subr.mxu0 0.0
      %766 = vmatpush1.msra.mxu0 0.0
      %767 = vmatprep.subr.mxu0 0.0
      %768 = vmatpush1.msra.mxu0 0.0
      %769 = vmatprep.subr.mxu0 0.0
      %770 = vmatpush1.msra.mxu0 0.0
      %771 = vmatprep.subr.mxu0 0.0
      %772 = vmatpush1.msra.mxu0 0.0
      %773 = vmatprep.subr.mxu0 0.0
      %774 = vmatpush1.msra.mxu0 0.0
      %775 = vmatprep.subr.mxu0 0.0
      %776 = vmatpush1.msra.mxu0 0.0
      %777 = vmatprep.subr.mxu0 0.0
      %778 = vmatpush1.msra.mxu0 0.0
      %779 = vmatprep.subr.mxu0 0.0
      %780 = vmatpush1.msra.mxu0 0.0
      %781 = vmatprep.subr.mxu0 0.0
      %782 = vmatpush1.msra.mxu0 0.0
      %783 = vmatprep.subr.mxu0 0.0
      %784 = vmatpush1.msra.mxu0 0.0
      %785 = vmatprep.mubr.f32.mxu0 0.0
      %786 = vmatmul.mubr.f32.gmra.mrb[0].mxu0 %v716
      %v787 = vpop.f32.mrb[0].mxu0
      %v788 = vadd.f32 %v713, %v787
      %v789 = vpop.f32.mrb[0].mxu0
      %790 = vmatprep.mubr.f32.mxu0 0.0
      %791 = vmatmul.mubr.f32.gmra.mrb[0].mxu0 %v719
      %v792 = vpop.f32.mrb[0].mxu0
      %v793 = vadd.f32 %v713, %v792
      %v794 = vpop.f32.mrb[0].mxu0
      %795 = vdwg.mxu0
      %v796 = vld [vmem:[%s5] sm:$0xf]
      %v797 = vld [vmem:[%s6] sm:$0x1]
      %v799 = vlaneseq
      %v800 = vshrl.u32 %v799, 7
      %v801 = vsub.s32 0, %v800
      %v802 = vrot.slane %v797, %v801
      %v804 = vsel %vm561, %v549, 0
      %v806 = vsel %vm561, %v550, 0
      %v809 = vsel %vm601, %v796, 0
      %811 = vmatprep.subr.mxu0 0.0
      %812 = vmatpush1.msra.mxu0 %v809
      %813 = vmatprep.subr.mxu0 0.0
      %814 = vmatpush1.msra.mxu0 0.0
      %815 = vmatprep.subr.mxu0 0.0
      %816 = vmatpush1.msra.mxu0 0.0
      %817 = vmatprep.subr.mxu0 0.0
      %818 = vmatpush1.msra.mxu0 0.0
      %819 = vmatprep.subr.mxu0 0.0
      %820 = vmatpush1.msra.mxu0 0.0
      %821 = vmatprep.subr.mxu0 0.0
      %822 = vmatpush1.msra.mxu0 0.0
      %823 = vmatprep.subr.mxu0 0.0
      %824 = vmatpush1.msra.mxu0 0.0
      %825 = vmatprep.subr.mxu0 0.0
      %826 = vmatpush1.msra.mxu0 0.0
      %827 = vmatprep.subr.mxu0 0.0
      %828 = vmatpush1.msra.mxu0 0.0
      %829 = vmatprep.subr.mxu0 0.0
      %830 = vmatpush1.msra.mxu0 0.0
      %831 = vmatprep.subr.mxu0 0.0
      %832 = vmatpush1.msra.mxu0 0.0
      %833 = vmatprep.subr.mxu0 0.0
      %834 = vmatpush1.msra.mxu0 0.0
      %835 = vmatprep.subr.mxu0 0.0
      %836 = vmatpush1.msra.mxu0 0.0
      %837 = vmatprep.subr.mxu0 0.0
      %838 = vmatpush1.msra.mxu0 0.0
      %839 = vmatprep.subr.mxu0 0.0
      %840 = vmatpush1.msra.mxu0 0.0
      %841 = vmatprep.subr.mxu0 0.0
      %842 = vmatpush1.msra.mxu0 0.0
      %843 = vmatprep.subr.mxu0 0.0
      %844 = vmatpush1.msra.mxu0 0.0
      %845 = vmatprep.subr.mxu0 0.0
      %846 = vmatpush1.msra.mxu0 0.0
      %847 = vmatprep.subr.mxu0 0.0
      %848 = vmatpush1.msra.mxu0 0.0
      %849 = vmatprep.subr.mxu0 0.0
      %850 = vmatpush1.msra.mxu0 0.0
      %851 = vmatprep.subr.mxu0 0.0
      %852 = vmatpush1.msra.mxu0 0.0
      %853 = vmatprep.subr.mxu0 0.0
      %854 = vmatpush1.msra.mxu0 0.0
      %855 = vmatprep.subr.mxu0 0.0
      %856 = vmatpush1.msra.mxu0 0.0
      %857 = vmatprep.subr.mxu0 0.0
      %858 = vmatpush1.msra.mxu0 0.0
      %859 = vmatprep.subr.mxu0 0.0
      %860 = vmatpush1.msra.mxu0 0.0
      %861 = vmatprep.subr.mxu0 0.0
      %862 = vmatpush1.msra.mxu0 0.0
      %863 = vmatprep.subr.mxu0 0.0
      %864 = vmatpush1.msra.mxu0 0.0
      %865 = vmatprep.subr.mxu0 0.0
      %866 = vmatpush1.msra.mxu0 0.0
      %867 = vmatprep.subr.mxu0 0.0
      %868 = vmatpush1.msra.mxu0 0.0
      %869 = vmatprep.subr.mxu0 0.0
      %870 = vmatpush1.msra.mxu0 0.0
      %871 = vmatprep.subr.mxu0 0.0
      %872 = vmatpush1.msra.mxu0 0.0
      %873 = vmatprep.subr.mxu0 0.0
      %874 = vmatpush1.msra.mxu0 0.0
      %875 = vmatprep.mubr.f32.mxu0 0.0
      %876 = vmatmul.mubr.f32.gmra.mrb[0].mxu0 %v804
      %v877 = vpop.f32.mrb[0].mxu0
      %v878 = vadd.f32 %v802, %v877
      %v879 = vpop.f32.mrb[0].mxu0
      %880 = vmatprep.mubr.f32.mxu0 0.0
      %881 = vmatmul.mubr.f32.gmra.mrb[0].mxu0 %v806
      %v882 = vpop.f32.mrb[0].mxu0
      %v883 = vadd.f32 %v802, %v882
      %v884 = vpop.f32.mrb[0].mxu0
      %885 = vdwg.mxu0
      %v886 = vadd.f32 %v788, %v878
      %v887 = vadd.f32 %v793, %v883
      %v888 = vtanh.pop %v886
      %v889 = vtanh.pop %v887
      %v890 = vld [vmem:[%s7] sm:$0xff]
      %v891 = vld [vmem:[%s7 + $0x8] sm:$0xff]
      %v892 = vld [vmem:[%s7 + $0x10] sm:$0xff]
      %v893 = vld [vmem:[%s8] sm:$0x1]
      %v894 = vld [vmem:[%s9] sm:$0xff]
      %v895 = vld [vmem:[%s9 + $0x8] sm:$0xff]
      %v896 = vld [vmem:[%s9 + $0x10] sm:$0xff]
      %v897 = vld [vmem:[%s10] sm:$0x1]
      %898 = vst.msk [vmem:[#allocation2] sm:$0xff] %vm558, 0.0
      %899 = vst.msk [vmem:[#allocation2 + $0x8] sm:$0xff] %vm558, 0.0
      %900 = vst.msk [vmem:[#allocation2 + $0x4] sm:$0xff] %vm682, %v888
      %vm901 = vcmask 60416
      %902 = vst.msk [vmem:[#allocation2 + $0xc] sm:$0xf] %vm901, %v889
      %905 = vrot.lane.b32.xlu0 %v888, 8
      %v906 = vpop.permute.xlu0 %905
      %907 = vrot.lane.b32.xlu0 %v889, 8
      %v908 = vpop.permute.xlu0 %907
      %911 = vst.msk [vmem:[#allocation2 + $0x2] sm:$0xff] %vm694, %v906
      %vm912 = vcmask 128064
      %913 = vst.msk [vmem:[#allocation2 + $0xa] sm:$0x3f] %vm912, %v908
      %914 = vrot.lane.b32.xlu0 %v888, 16
      %v915 = vpop.permute.xlu0 %914
      %916 = vrot.lane.b32.xlu0 %v889, 16
      %v917 = vpop.permute.xlu0 %916
      %920 = vst.msk [vmem:[#allocation2] sm:$0xff] %vm704, %v915
      %921 = vst.msk [vmem:[#allocation2 + $0x8] sm:$0xff] %vm704, %v917
      %v922 = vld [vmem:[#allocation2] sm:$0xff]
      %v923 = vld [vmem:[#allocation2 + $0x8] sm:$0xff]
      %v925 = vlaneseq
      %v926 = vshrl.u32 %v925, 7
      %v927 = vsub.s32 0, %v926
      %v928 = vrot.slane %v893, %v927
      %v931 = vsel %vm558, %v922, 0
      %v934 = vsel %vm558, %v923, 0
      %936 = vmatprep.subr.mxu0 0.0
      %937 = vmatpush1.msra.mxu0 %v890
      %938 = vmatprep.subr.mxu0 0.0
      %939 = vmatpush1.msra.mxu0 %v891
      %940 = vmatprep.subr.mxu0 0.0
      %941 = vmatpush1.msra.mxu0 %v892
      %942 = vmatprep.subr.mxu0 0.0
      %943 = vmatpush1.msra.mxu0 0.0
      %944 = vmatprep.subr.mxu0 0.0
      %945 = vmatpush1.msra.mxu0 0.0
      %946 = vmatprep.subr.mxu0 0.0
      %947 = vmatpush1.msra.mxu0 0.0
      %948 = vmatprep.subr.mxu0 0.0
      %949 = vmatpush1.msra.mxu0 0.0
      %950 = vmatprep.subr.mxu0 0.0
      %951 = vmatpush1.msra.mxu0 0.0
      %952 = vmatprep.subr.mxu0 0.0
      %953 = vmatpush1.msra.mxu0 0.0
      %954 = vmatprep.subr.mxu0 0.0
      %955 = vmatpush1.msra.mxu0 0.0
      %956 = vmatprep.subr.mxu0 0.0
      %957 = vmatpush1.msra.mxu0 0.0
      %958 = vmatprep.subr.mxu0 0.0
      %959 = vmatpush1.msra.mxu0 0.0
      %960 = vmatprep.subr.mxu0 0.0
      %961 = vmatpush1.msra.mxu0 0.0
      %962 = vmatprep.subr.mxu0 0.0
      %963 = vmatpush1.msra.mxu0 0.0
      %964 = vmatprep.subr.mxu0 0.0
      %965 = vmatpush1.msra.mxu0 0.0
      %966 = vmatprep.subr.mxu0 0.0
      %967 = vmatpush1.msra.mxu0 0.0
      %968 = vmatprep.subr.mxu0 0.0
      %969 = vmatpush1.msra.mxu0 0.0
      %970 = vmatprep.subr.mxu0 0.0
      %971 = vmatpush1.msra.mxu0 0.0
      %972 = vmatprep.subr.mxu0 0.0
      %973 = vmatpush1.msra.mxu0 0.0
      %974 = vmatprep.subr.mxu0 0.0
      %975 = vmatpush1.msra.mxu0 0.0
      %976 = vmatprep.subr.mxu0 0.0
      %977 = vmatpush1.msra.mxu0 0.0
      %978 = vmatprep.subr.mxu0 0.0
      %979 = vmatpush1.msra.mxu0 0.0
      %980 = vmatprep.subr.mxu0 0.0
      %981 = vmatpush1.msra.mxu0 0.0
      %982 = vmatprep.subr.mxu0 0.0
      %983 = vmatpush1.msra.mxu0 0.0
      %984 = vmatprep.subr.mxu0 0.0
      %985 = vmatpush1.msra.mxu0 0.0
      %986 = vmatprep.subr.mxu0 0.0
      %987 = vmatpush1.msra.mxu0 0.0
      %988 = vmatprep.subr.mxu0 0.0
      %989 = vmatpush1.msra.mxu0 0.0
      %990 = vmatprep.subr.mxu0 0.0
      %991 = vmatpush1.msra.mxu0 0.0
      %992 = vmatprep.subr.mxu0 0.0
      %993 = vmatpush1.msra.mxu0 0.0
      %994 = vmatprep.subr.mxu0 0.0
      %995 = vmatpush1.msra.mxu0 0.0
      %996 = vmatprep.subr.mxu0 0.0
      %997 = vmatpush1.msra.mxu0 0.0
      %998 = vmatprep.subr.mxu0 0.0
      %999 = vmatpush1.msra.mxu0 0.0
      %1000 = vmatprep.mubr.f32.mxu0 0.0
      %1001 = vmatmul.mubr.f32.gmra.mrb[0].mxu0 %v931
      %v1002 = vpop.f32.mrb[0].mxu0
      %v1003 = vadd.f32 %v928, %v1002
      %v1004 = vpop.f32.mrb[0].mxu0
      %1005 = vmatprep.mubr.f32.mxu0 0.0
      %1006 = vmatmul.mubr.f32.gmra.mrb[0].mxu0 %v934
      %v1007 = vpop.f32.mrb[0].mxu0
      %v1008 = vadd.f32 %v928, %v1007
      %v1009 = vpop.f32.mrb[0].mxu0
      %1010 = vdwg.mxu0
      %1011 = vst.msk [vmem:[#allocation2] sm:$0xff] %vm558, 0.0
      %1012 = vst.msk [vmem:[#allocation2 + $0x8] sm:$0xff] %vm558, 0.0
      %1013 = vst.msk [vmem:[#allocation2 + $0x4] sm:$0xff] %vm682, %v1003
      %1014 = vst.msk [vmem:[#allocation2 + $0xc] sm:$0xf] %vm901, %v1008
      %1017 = vrot.lane.b32.xlu0 %v1003, 8
      %v1018 = vpop.permute.xlu0 %1017
      %1019 = vrot.lane.b32.xlu0 %v1008, 8
      %v1020 = vpop.permute.xlu0 %1019
      %1023 = vst.msk [vmem:[#allocation2 + $0x2] sm:$0xff] %vm694, %v1018
      %1024 = vst.msk [vmem:[#allocation2 + $0xa] sm:$0x3f] %vm912, %v1020
      %1025 = vrot.lane.b32.xlu0 %v1003, 16
      %v1026 = vpop.permute.xlu0 %1025
      %1027 = vrot.lane.b32.xlu0 %v1008, 16
      %v1028 = vpop.permute.xlu0 %1027
      %1031 = vst.msk [vmem:[#allocation2] sm:$0xff] %vm704, %v1026
      %1032 = vst.msk [vmem:[#allocation2 + $0x8] sm:$0xff] %vm704, %v1028
      %v1033 = vld [vmem:[#allocation2] sm:$0xff]
      %v1034 = vld [vmem:[#allocation2 + $0x8] sm:$0xff]
      %v1036 = vlaneseq
      %v1037 = vshrl.u32 %v1036, 7
      %v1038 = vsub.s32 0, %v1037
      %v1039 = vrot.slane %v897, %v1038
      %v1042 = vsel %vm558, %v1033, 0
      %v1045 = vsel %vm558, %v1034, 0
      %1047 = vmatprep.subr.mxu0 0.0
      %1048 = vmatpush1.msra.mxu0 %v894
      %1049 = vmatprep.subr.mxu0 0.0
      %1050 = vmatpush1.msra.mxu0 %v895
      %1051 = vmatprep.subr.mxu0 0.0
      %1052 = vmatpush1.msra.mxu0 %v896
      %1053 = vmatprep.subr.mxu0 0.0
      %1054 = vmatpush1.msra.mxu0 0.0
      %1055 = vmatprep.subr.mxu0 0.0
      %1056 = vmatpush1.msra.mxu0 0.0
      %1057 = vmatprep.subr.mxu0 0.0
      %1058 = vmatpush1.msra.mxu0 0.0
      %1059 = vmatprep.subr.mxu0 0.0
      %1060 = vmatpush1.msra.mxu0 0.0
      %1061 = vmatprep.subr.mxu0 0.0
      %1062 = vmatpush1.msra.mxu0 0.0
      %1063 = vmatprep.subr.mxu0 0.0
      %1064 = vmatpush1.msra.mxu0 0.0
      %1065 = vmatprep.subr.mxu0 0.0
      %1066 = vmatpush1.msra.mxu0 0.0
      %1067 = vmatprep.subr.mxu0 0.0
      %1068 = vmatpush1.msra.mxu0 0.0
      %1069 = vmatprep.subr.mxu0 0.0
      %1070 = vmatpush1.msra.mxu0 0.0
      %1071 = vmatprep.subr.mxu0 0.0
      %1072 = vmatpush1.msra.mxu0 0.0
      %1073 = vmatprep.subr.mxu0 0.0
      %1074 = vmatpush1.msra.mxu0 0.0
      %1075 = vmatprep.subr.mxu0 0.0
      %1076 = vmatpush1.msra.mxu0 0.0
      %1077 = vmatprep.subr.mxu0 0.0
      %1078 = vmatpush1.msra.mxu0 0.0
      %1079 = vmatprep.subr.mxu0 0.0
      %1080 = vmatpush1.msra.mxu0 0.0
      %1081 = vmatprep.subr.mxu0 0.0
      %1082 = vmatpush1.msra.mxu0 0.0
      %1083 = vmatprep.subr.mxu0 0.0
      %1084 = vmatpush1.msra.mxu0 0.0
      %1085 = vmatprep.subr.mxu0 0.0
      %1086 = vmatpush1.msra.mxu0 0.0
      %1087 = vmatprep.subr.mxu0 0.0
      %1088 = vmatpush1.msra.mxu0 0.0
      %1089 = vmatprep.subr.mxu0 0.0
      %1090 = vmatpush1.msra.mxu0 0.0
      %1091 = vmatprep.subr.mxu0 0.0
      %1092 = vmatpush1.msra.mxu0 0.0
      %1093 = vmatprep.subr.mxu0 0.0
      %1094 = vmatpush1.msra.mxu0 0.0
      %1095 = vmatprep.subr.mxu0 0.0
      %1096 = vmatpush1.msra.mxu0 0.0
      %1097 = vmatprep.subr.mxu0 0.0
      %1098 = vmatpush1.msra.mxu0 0.0
      %1099 = vmatprep.subr.mxu0 0.0
      %1100 = vmatpush1.msra.mxu0 0.0
      %1101 = vmatprep.subr.mxu0 0.0
      %1102 = vmatpush1.msra.mxu0 0.0
      %1103 = vmatprep.subr.mxu0 0.0
      %1104 = vmatpush1.msra.mxu0 0.0
      %1105 = vmatprep.subr.mxu0 0.0
      %1106 = vmatpush1.msra.mxu0 0.0
      %1107 = vmatprep.subr.mxu0 0.0
      %1108 = vmatpush1.msra.mxu0 0.0
      %1109 = vmatprep.subr.mxu0 0.0
      %1110 = vmatpush1.msra.mxu0 0.0
      %1111 = vmatprep.mubr.f32.mxu0 0.0
      %1112 = vmatmul.mubr.f32.gmra.mrb[0].mxu0 %v1042
      %v1113 = vpop.f32.mrb[0].mxu0
      %v1114 = vadd.f32 %v1039, %v1113
      %v1115 = vpop.f32.mrb[0].mxu0
      %1116 = vmatprep.mubr.f32.mxu0 0.0
      %1117 = vmatmul.mubr.f32.gmra.mrb[0].mxu0 %v1045
      %v1118 = vpop.f32.mrb[0].mxu0
      %v1119 = vadd.f32 %v1039, %v1118
      %v1120 = vpop.f32.mrb[0].mxu0
      %1121 = vdwg.mxu0
      %v1122 = vadd.f32 %v1114, %v888
      %v1123 = vadd.f32 %v1119, %v889
      %v1124 = vtanh.pop %v1122
      %v1125 = vtanh.pop %v1123
      %v1126 = vld [vmem:[%s11] sm:$0xff]
      %v1127 = vld [vmem:[%s11 + $0x8] sm:$0xff]
      %v1128 = vld [vmem:[%s11 + $0x10] sm:$0xff]
      %v1129 = vld [vmem:[%s12] sm:$0x1]
      %v1130 = vld [vmem:[%s13] sm:$0xff]
      %v1131 = vld [vmem:[%s13 + $0x8] sm:$0xf]
      %v1132 = vld [vmem:[%s14] sm:$0x1]
      %1133 = vst.msk [vmem:[#allocation2] sm:$0xff] %vm558, 0.0
      %1134 = vst.msk [vmem:[#allocation2 + $0x8] sm:$0xff] %vm558, 0.0
      %1135 = vst.msk [vmem:[#allocation2 + $0x8] sm:$0xff] %vm682, %v1124
      %1138 = vrot.lane.b32.xlu0 %v1124, 8
      %v1139 = vpop.permute.xlu0 %1138
      %1140 = vrot.lane.b32.xlu0 %v1125, 8
      %v1141 = vpop.permute.xlu0 %1140
      %1144 = vst.msk [vmem:[#allocation2 + $0x4] sm:$0xff] %vm694, %v1139
      %vm1145 = vcmask 126016
      %1146 = vst.msk [vmem:[#allocation2 + $0xc] sm:$0xf] %vm1145, %v1141
      %1147 = vrot.lane.b32.xlu0 %v1124, 16
      %v1148 = vpop.permute.xlu0 %1147
      %1149 = vrot.lane.b32.xlu0 %v1125, 16
      %v1150 = vpop.permute.xlu0 %1149
      %1153 = vst.msk [vmem:[#allocation2] sm:$0xff] %vm704, %v1148
      %1154 = vst.msk [vmem:[#allocation2 + $0x8] sm:$0xff] %vm704, %v1150
      %v1155 = vld [vmem:[#allocation2] sm:$0xff]
      %v1156 = vld [vmem:[#allocation2 + $0x8] sm:$0xff]
      %v1158 = vlaneseq
      %v1159 = vshrl.u32 %v1158, 7
      %v1160 = vsub.s32 0, %v1159
      %v1161 = vrot.slane %v1129, %v1160
      %v1164 = vsel %vm558, %v1155, 0
      %v1167 = vsel %vm558, %v1156, 0
      %1169 = vmatprep.subr.mxu0 0.0
      %1170 = vmatpush1.msra.mxu0 %v1126
      %1171 = vmatprep.subr.mxu0 0.0
      %1172 = vmatpush1.msra.mxu0 %v1127
      %1173 = vmatprep.subr.mxu0 0.0
      %1174 = vmatpush1.msra.mxu0 %v1128
      %1175 = vmatprep.subr.mxu0 0.0
      %1176 = vmatpush1.msra.mxu0 0.0
      %1177 = vmatprep.subr.mxu0 0.0
      %1178 = vmatpush1.msra.mxu0 0.0
      %1179 = vmatprep.subr.mxu0 0.0
      %1180 = vmatpush1.msra.mxu0 0.0
      %1181 = vmatprep.subr.mxu0 0.0
      %1182 = vmatpush1.msra.mxu0 0.0
      %1183 = vmatprep.subr.mxu0 0.0
      %1184 = vmatpush1.msra.mxu0 0.0
      %1185 = vmatprep.subr.mxu0 0.0
      %1186 = vmatpush1.msra.mxu0 0.0
      %1187 = vmatprep.subr.mxu0 0.0
      %1188 = vmatpush1.msra.mxu0 0.0
      %1189 = vmatprep.subr.mxu0 0.0
      %1190 = vmatpush1.msra.mxu0 0.0
      %1191 = vmatprep.subr.mxu0 0.0
      %1192 = vmatpush1.msra.mxu0 0.0
      %1193 = vmatprep.subr.mxu0 0.0
      %1194 = vmatpush1.msra.mxu0 0.0
      %1195 = vmatprep.subr.mxu0 0.0
      %1196 = vmatpush1.msra.mxu0 0.0
      %1197 = vmatprep.subr.mxu0 0.0
      %1198 = vmatpush1.msra.mxu0 0.0
      %1199 = vmatprep.subr.mxu0 0.0
      %1200 = vmatpush1.msra.mxu0 0.0
      %1201 = vmatprep.subr.mxu0 0.0
      %1202 = vmatpush1.msra.mxu0 0.0
      %1203 = vmatprep.subr.mxu0 0.0
      %1204 = vmatpush1.msra.mxu0 0.0
      %1205 = vmatprep.subr.mxu0 0.0
      %1206 = vmatpush1.msra.mxu0 0.0
      %1207 = vmatprep.subr.mxu0 0.0
      %1208 = vmatpush1.msra.mxu0 0.0
      %1209 = vmatprep.subr.mxu0 0.0
      %1210 = vmatpush1.msra.mxu0 0.0
      %1211 = vmatprep.subr.mxu0 0.0
      %1212 = vmatpush1.msra.mxu0 0.0
      %1213 = vmatprep.subr.mxu0 0.0
      %1214 = vmatpush1.msra.mxu0 0.0
      %1215 = vmatprep.subr.mxu0 0.0
      %1216 = vmatpush1.msra.mxu0 0.0
      %1217 = vmatprep.subr.mxu0 0.0
      %1218 = vmatpush1.msra.mxu0 0.0
      %1219 = vmatprep.subr.mxu0 0.0
      %1220 = vmatpush1.msra.mxu0 0.0
      %1221 = vmatprep.subr.mxu0 0.0
      %1222 = vmatpush1.msra.mxu0 0.0
      %1223 = vmatprep.subr.mxu0 0.0
      %1224 = vmatpush1.msra.mxu0 0.0
      %1225 = vmatprep.subr.mxu0 0.0
      %1226 = vmatpush1.msra.mxu0 0.0
      %1227 = vmatprep.subr.mxu0 0.0
      %1228 = vmatpush1.msra.mxu0 0.0
      %1229 = vmatprep.subr.mxu0 0.0
      %1230 = vmatpush1.msra.mxu0 0.0
      %1231 = vmatprep.subr.mxu0 0.0
      %1232 = vmatpush1.msra.mxu0 0.0
      %1233 = vmatprep.mubr.f32.mxu0 0.0
      %1234 = vmatmul.mubr.f32.gmra.mrb[0].mxu0 %v1164
      %v1235 = vpop.f32.mrb[0].mxu0
      %v1236 = vadd.f32 %v1161, %v1235
      %v1237 = vpop.f32.mrb[0].mxu0
      %1238 = vmatprep.mubr.f32.mxu0 0.0
      %1239 = vmatmul.mubr.f32.gmra.mrb[0].mxu0 %v1167
      %v1240 = vpop.f32.mrb[0].mxu0
      %v1241 = vadd.f32 %v1161, %v1240
      %v1242 = vpop.f32.mrb[0].mxu0
      %1243 = vdwg.mxu0
      %1244 = vst.msk [vmem:[#allocation2] sm:$0xff] %vm558, 0.0
      %1245 = vst.msk [vmem:[#allocation2 + $0x8] sm:$0xff] %vm558, 0.0
      %1246 = vst.msk [vmem:[#allocation2 + $0x8] sm:$0xff] %vm561, %v1236
      %1249 = vrot.lane.b32.xlu0 %v1236, 4
      %v1250 = vpop.permute.xlu0 %1249
      %1251 = vrot.lane.b32.xlu0 %v1241, 4
      %v1252 = vpop.permute.xlu0 %1251
      %1255 = vst.msk [vmem:[#allocation2 + $0x4] sm:$0xff] %vm573, %v1250
      %vm1256 = vcmask 60448
      %1257 = vst.msk [vmem:[#allocation2 + $0xc] sm:$0xf] %vm1256, %v1252
      %1258 = vrot.lane.b32.xlu0 %v1236, 8
      %v1259 = vpop.permute.xlu0 %1258
      %1260 = vrot.lane.b32.xlu0 %v1241, 8
      %v1261 = vpop.permute.xlu0 %1260
      %1264 = vst.msk [vmem:[#allocation2] sm:$0xff] %vm583, %v1259
      %1265 = vst.msk [vmem:[#allocation2 + $0x8] sm:$0xff] %vm583, %v1261
      %v1266 = vld [vmem:[#allocation2] sm:$0xff]
      %v1267 = vld [vmem:[#allocation2 + $0x8] sm:$0xff]
      %v1269 = vlaneseq
      %v1270 = vshrl.u32 %v1269, 7
      %v1271 = vsub.s32 0, %v1270
      %v1272 = vrot.slane %v1132, %v1271
      %v1275 = vsel %vm594, %v1266, 0
      %v1278 = vsel %vm594, %v1267, 0
      %v1281 = vsel %vm601, %v1131, 0
      %1283 = vmatprep.subr.mxu0 0.0
      %1284 = vmatpush1.msra.mxu0 %v1130
      %1285 = vmatprep.subr.mxu0 0.0
      %1286 = vmatpush1.msra.mxu0 %v1281
      %1287 = vmatprep.subr.mxu0 0.0
      %1288 = vmatpush1.msra.mxu0 0.0
      %1289 = vmatprep.subr.mxu0 0.0
      %1290 = vmatpush1.msra.mxu0 0.0
      %1291 = vmatprep.subr.mxu0 0.0
      %1292 = vmatpush1.msra.mxu0 0.0
      %1293 = vmatprep.subr.mxu0 0.0
      %1294 = vmatpush1.msra.mxu0 0.0
      %1295 = vmatprep.subr.mxu0 0.0
      %1296 = vmatpush1.msra.mxu0 0.0
      %1297 = vmatprep.subr.mxu0 0.0
      %1298 = vmatpush1.msra.mxu0 0.0
      %1299 = vmatprep.subr.mxu0 0.0
      %1300 = vmatpush1.msra.mxu0 0.0
      %1301 = vmatprep.subr.mxu0 0.0
      %1302 = vmatpush1.msra.mxu0 0.0
      %1303 = vmatprep.subr.mxu0 0.0
      %1304 = vmatpush1.msra.mxu0 0.0
      %1305 = vmatprep.subr.mxu0 0.0
      %1306 = vmatpush1.msra.mxu0 0.0
      %1307 = vmatprep.subr.mxu0 0.0
      %1308 = vmatpush1.msra.mxu0 0.0
      %1309 = vmatprep.subr.mxu0 0.0
      %1310 = vmatpush1.msra.mxu0 0.0
      %1311 = vmatprep.subr.mxu0 0.0
      %1312 = vmatpush1.msra.mxu0 0.0
      %1313 = vmatprep.subr.mxu0 0.0
      %1314 = vmatpush1.msra.mxu0 0.0
      %1315 = vmatprep.subr.mxu0 0.0
      %1316 = vmatpush1.msra.mxu0 0.0
      %1317 = vmatprep.subr.mxu0 0.0
      %1318 = vmatpush1.msra.mxu0 0.0
      %1319 = vmatprep.subr.mxu0 0.0
      %1320 = vmatpush1.msra.mxu0 0.0
      %1321 = vmatprep.subr.mxu0 0.0
      %1322 = vmatpush1.msra.mxu0 0.0
      %1323 = vmatprep.subr.mxu0 0.0
      %1324 = vmatpush1.msra.mxu0 0.0
      %1325 = vmatprep.subr.mxu0 0.0
      %1326 = vmatpush1.msra.mxu0 0.0
      %1327 = vmatprep.subr.mxu0 0.0
      %1328 = vmatpush1.msra.mxu0 0.0
      %1329 = vmatprep.subr.mxu0 0.0
      %1330 = vmatpush1.msra.mxu0 0.0
      %1331 = vmatprep.subr.mxu0 0.0
      %1332 = vmatpush1.msra.mxu0 0.0
      %1333 = vmatprep.subr.mxu0 0.0
      %1334 = vmatpush1.msra.mxu0 0.0
      %1335 = vmatprep.subr.mxu0 0.0
      %1336 = vmatpush1.msra.mxu0 0.0
      %1337 = vmatprep.subr.mxu0 0.0
      %1338 = vmatpush1.msra.mxu0 0.0
      %1339 = vmatprep.subr.mxu0 0.0
      %1340 = vmatpush1.msra.mxu0 0.0
      %1341 = vmatprep.subr.mxu0 0.0
      %1342 = vmatpush1.msra.mxu0 0.0
      %1343 = vmatprep.subr.mxu0 0.0
      %1344 = vmatpush1.msra.mxu0 0.0
      %1345 = vmatprep.subr.mxu0 0.0
      %1346 = vmatpush1.msra.mxu0 0.0
      %1347 = vmatprep.mubr.f32.mxu0 0.0
      %1348 = vmatmul.mubr.f32.gmra.mrb[0].mxu0 %v1275
      %v1349 = vpop.f32.mrb[0].mxu0
      %v1350 = vadd.f32 %v1272, %v1349
      %v1351 = vpop.f32.mrb[0].mxu0
      %1352 = vmatprep.mubr.f32.mxu0 0.0
      %1353 = vmatmul.mubr.f32.gmra.mrb[0].mxu0 %v1278
      %v1354 = vpop.f32.mrb[0].mxu0
      %v1355 = vadd.f32 %v1272, %v1354
      %v1356 = vpop.f32.mrb[0].mxu0
      %1357 = vdwg.mxu0
      %v1358 = vld [vmem:[%s15] sm:$0xff]
      %v1359 = vld [vmem:[%s16] sm:$0x1]
      %v1361 = vlaneseq
      %v1362 = vshrl.u32 %v1361, 7
      %v1363 = vsub.s32 0, %v1362
      %v1364 = vrot.slane %v1359, %v1363
      %v1366 = vsel %vm682, %v1124, 0
      %v1368 = vsel %vm682, %v1125, 0
      %1370 = vmatprep.subr.mxu0 0.0
      %1371 = vmatpush1.msra.mxu0 %v1358
      %1372 = vmatprep.subr.mxu0 0.0
      %1373 = vmatpush1.msra.mxu0 0.0
      %1374 = vmatprep.subr.mxu0 0.0
      %1375 = vmatpush1.msra.mxu0 0.0
      %1376 = vmatprep.subr.mxu0 0.0
      %1377 = vmatpush1.msra.mxu0 0.0
      %1378 = vmatprep.subr.mxu0 0.0
      %1379 = vmatpush1.msra.mxu0 0.0
      %1380 = vmatprep.subr.mxu0 0.0
      %1381 = vmatpush1.msra.mxu0 0.0
      %1382 = vmatprep.subr.mxu0 0.0
      %1383 = vmatpush1.msra.mxu0 0.0
      %1384 = vmatprep.subr.mxu0 0.0
      %1385 = vmatpush1.msra.mxu0 0.0
      %1386 = vmatprep.subr.mxu0 0.0
      %1387 = vmatpush1.msra.mxu0 0.0
      %1388 = vmatprep.subr.mxu0 0.0
      %1389 = vmatpush1.msra.mxu0 0.0
      %1390 = vmatprep.subr.mxu0 0.0
      %1391 = vmatpush1.msra.mxu0 0.0
      %1392 = vmatprep.subr.mxu0 0.0
      %1393 = vmatpush1.msra.mxu0 0.0
      %1394 = vmatprep.subr.mxu0 0.0
      %1395 = vmatpush1.msra.mxu0 0.0
      %1396 = vmatprep.subr.mxu0 0.0
      %1397 = vmatpush1.msra.mxu0 0.0
      %1398 = vmatprep.subr.mxu0 0.0
      %1399 = vmatpush1.msra.mxu0 0.0
      %1400 = vmatprep.subr.mxu0 0.0
      %1401 = vmatpush1.msra.mxu0 0.0
      %1402 = vmatprep.subr.mxu0 0.0
      %1403 = vmatpush1.msra.mxu0 0.0
      %1404 = vmatprep.subr.mxu0 0.0
      %1405 = vmatpush1.msra.mxu0 0.0
      %1406 = vmatprep.subr.mxu0 0.0
      %1407 = vmatpush1.msra.mxu0 0.0
      %1408 = vmatprep.subr.mxu0 0.0
      %1409 = vmatpush1.msra.mxu0 0.0
      %1410 = vmatprep.subr.mxu0 0.0
      %1411 = vmatpush1.msra.mxu0 0.0
      %1412 = vmatprep.subr.mxu0 0.0
      %1413 = vmatpush1.msra.mxu0 0.0
      %1414 = vmatprep.subr.mxu0 0.0
      %1415 = vmatpush1.msra.mxu0 0.0
      %1416 = vmatprep.subr.mxu0 0.0
      %1417 = vmatpush1.msra.mxu0 0.0
      %1418 = vmatprep.subr.mxu0 0.0
      %1419 = vmatpush1.msra.mxu0 0.0
      %1420 = vmatprep.subr.mxu0 0.0
      %1421 = vmatpush1.msra.mxu0 0.0
      %1422 = vmatprep.subr.mxu0 0.0
      %1423 = vmatpush1.msra.mxu0 0.0
      %1424 = vmatprep.subr.mxu0 0.0
      %1425 = vmatpush1.msra.mxu0 0.0
      %1426 = vmatprep.subr.mxu0 0.0
      %1427 = vmatpush1.msra.mxu0 0.0
      %1428 = vmatprep.subr.mxu0 0.0
      %1429 = vmatpush1.msra.mxu0 0.0
      %1430 = vmatprep.subr.mxu0 0.0
      %1431 = vmatpush1.msra.mxu0 0.0
      %1432 = vmatprep.subr.mxu0 0.0
      %1433 = vmatpush1.msra.mxu0 0.0
      %1434 = vmatprep.mubr.f32.mxu0 0.0
      %1435 = vmatmul.mubr.f32.gmra.mrb[0].mxu0 %v1366
      %v1436 = vpop.f32.mrb[0].mxu0
      %v1437 = vadd.f32 %v1364, %v1436
      %v1438 = vpop.f32.mrb[0].mxu0
      %1439 = vmatprep.mubr.f32.mxu0 0.0
      %1440 = vmatmul.mubr.f32.gmra.mrb[0].mxu0 %v1368
      %v1441 = vpop.f32.mrb[0].mxu0
      %v1442 = vadd.f32 %v1364, %v1441
      %v1443 = vpop.f32.mrb[0].mxu0
      %1444 = vdwg.mxu0
      %v1445 = vadd.f32 %v1350, %v1437
      %v1446 = vadd.f32 %v1355, %v1442
      %v1447 = vtanh.pop %v1445
      %v1448 = vtanh.pop %v1446
      %1449 = vst.msk [vmem:[%s548] sm:$0xff] %vm561, %v1447
      %1450 = vst.msk [vmem:[%s548 + $0x8] sm:$0xff] %vm561, %v1448
      %p1451 = scmp.lt.s32.totalorder %s28, 1
      %s1452 = scalar_select %p1451, %s28, 1
      %s1453 = smul.addr %s1452, 2
      %s1454 = smul.addr %s1453, 8
      %s1455 = scalar_lea.vmem %s17, %s1454
      // Predicated region
      $region89: #{tpu_custom_call.1} parent=87 // pred_check
        %p1456 = pneg %p408
      $region90: #{tpu_custom_call.1} parent=87 // pred_check_branch
        %1458 = sbr.rel (%p1456) target = $region92
      $region91: #{tpu_custom_call.1} parent=87 // pred_region
        _
      $region92: #{tpu_custom_call.1} parent=87 // pred_fallthru
        _
    $region88: #{tpu_custom_call.1} parent=5 // pred_fallthru
      _
    %p1459 = scmp.le.s32.totalorder 2, %s23
    // Predicated region
    $region93: #{tpu_custom_call.1} parent=5 // pred_check
      %p1460 = pneg %p1459
    $region94: #{tpu_custom_call.1} parent=5 // pred_check_branch
      %1462 = sbr.rel (%p1460) target = $region96
    $region95: #{tpu_custom_call.1} parent=5 // pred_region
      %s1463 = ssub.s32 %s23, 2
      // Predicated region
      $region97: #{tpu_custom_call.1} parent=95 // pred_check
        %p1464 = pneg %p414
      $region98: #{tpu_custom_call.1} parent=95 // pred_check_branch
        %1466 = sbr.rel (%p1464) target = $region100
      $region99: #{tpu_custom_call.1} parent=95 // pred_region
        %p1467 = scmp.lt.s32.totalorder %s29, 1
        %s1468 = scalar_select %p1467, %s29, 1
        %s1469 = smul.addr %s1468, 2
        %s1470 = smul.addr %s1469, 8
        %s1471 = scalar_lea.vmem %s17, %s1470
      $region100: #{tpu_custom_call.1} parent=95 // pred_fallthru
        _
    $region96: #{tpu_custom_call.1} parent=5 // pred_fallthru
      _
  $region6: #{tpu_custom_call.1} parent=0 // loop_footer
    %s27 = sadd.s32 1, %s23
  $region7: #{tpu_custom_call.1} parent=0 // loop_footer_branch
    %22 = sbr.rel target = $region3
  $region8: #{tpu_custom_call.1} parent=0 // loop_exit
    _

</llo_original>
